<compile_context>
chip_gen: v5e
topology: v5e:2x2
jax: 0.10.0
libtpu: 0.0.40
codegen_flags: <defaults>
</compile_context>

<pallas_src>
import numpy as np
import jax
import jax.numpy as jnp
from jax.experimental import pallas as pl
from jax.experimental.pallas import tpu as pltpu


# ----------------------------------------------------------------------------
# Parameter init (deterministic, matches the PyTorch _init_weights exactly).
# ----------------------------------------------------------------------------
def get_1d_sincos_pos_embed_from_grid(embed_dim, pos):
    assert embed_dim % 2 == 0
    omega = np.arange(embed_dim // 2, dtype=np.float64)
    omega /= embed_dim / 2.0
    omega = 1.0 / 10000 ** omega
    pos = pos.reshape(-1)
    out = np.einsum("m,d->md", pos, omega)
    emb_sin = np.sin(out)
    emb_cos = np.cos(out)
    return np.concatenate([emb_sin, emb_cos], axis=1)


def get_2d_sincos_pos_embed_from_grid(embed_dim, grid):
    assert embed_dim % 2 == 0
    emb_h = get_1d_sincos_pos_embed_from_grid(embed_dim // 2, grid[0])
    emb_w = get_1d_sincos_pos_embed_from_grid(embed_dim // 2, grid[1])
    return np.concatenate([emb_h, emb_w], axis=1)


def get_2d_sincos_pos_embed(embed_dim, grid_size):
    grid_h = np.arange(grid_size, dtype=np.float32)
    grid_w = np.arange(grid_size, dtype=np.float32)
    grid = np.meshgrid(grid_w, grid_h)
    grid = np.stack(grid, axis=0)
    grid = grid.reshape([2, 1, grid_size, grid_size])
    return get_2d_sincos_pos_embed_from_grid(embed_dim, grid)


def make_position_embedding_table(max_num_patch_per_side, hidden_size):
    tbl = get_2d_sincos_pos_embed(hidden_size, max_num_patch_per_side)
    return jnp.asarray(tbl.astype(np.float32))  # (P^2, H) float32


# ----------------------------------------------------------------------------
# Helpers.
# ----------------------------------------------------------------------------
def _round_up(x, m):
    return (x + m - 1) // m * m


def _vmem_capacity_bytes():
    try:
        return int(pltpu.get_tpu_info().vmem_capacity_bytes)
    except Exception:
        return 64 << 20  # conservative (v7x-sized) fallback


def _pick_id_block(n, p2, id_block_size, onehot_cap_bytes):
    """Multiple-of-128 id block; bounded by the one-hot temporary footprint and,
    when possible, chosen to divide N exactly (no padded tail / post-slice copy)."""
    tb_onehot = max(128, (onehot_cap_bytes // max(p2 * 4, 1)) // 128 * 128)
    tb = max(128, min(id_block_size, tb_onehot, _round_up(n, 128)))
    tb = tb // 128 * 128
    if n % 128 == 0:
        while n % tb:
            tb -= 128
    return tb


def _pick_hidden_chunk(p2, hp, tb, itemsize, budget):
    """Pick the hidden chunk TH (multiple-of-128 divisor of hp).

    Returns hp when the whole (single-buffered) table plus the double-buffered
    output block fits the budget; otherwise the largest chunk whose
    double-buffered table chunk + output block fits; 0 if even 128 doesn't fit."""
    fixed = 2 * tb * 4 + 3 * tb * p2 * 4          # ids block + one-hot/iota temps
    if (p2 * hp + 2 * tb * hp) * itemsize + fixed <= budget:   # table x1 (Buffered(1))
        return hp
    th = hp - 128
    while th >= 128:
        if hp % th == 0 and (2 * p2 * th + 2 * tb * th) * itemsize + fixed <= budget:
            return th                              # table chunk x2 (double-buffered)
        th -= 128
    return 0


# ----------------------------------------------------------------------------
# Pallas kernel: one-hot MXU gather with dense lane-wide stores.
# ----------------------------------------------------------------------------
def _onehot_gather_kernel(ids_ref, table_ref, out_ref):
    """Gather TB rows of the resident table via a one-hot matmul.

    ids_ref  : (TB, 1)  int32  VMEM  (ids of this block)
    table_ref: (P2, TH) table  VMEM  (resident across the id-block axis)
    out_ref  : (TB, TH) out    VMEM  (full lane/sublane-dense stores)
    """
    tb = out_ref.shape[0]
    p2 = table_ref.shape[0]
    tbl = table_ref[...]
    ids = ids_ref[...]                                        # (TB, 1)
    rows = jax.lax.broadcasted_iota(jnp.int32, (tb, p2), 1)   # (TB, P2)
    onehot = (ids == rows).astype(tbl.dtype)                  # exact 0/1 rows
    # With a one-hot LHS every cross term is zero, so HIGHEST precision keeps
    # f32 table values essentially exact through the MXU (bf16 is exact already).
    prec = (jax.lax.Precision.HIGHEST if tbl.dtype == jnp.float32
            else jax.lax.Precision.DEFAULT)
    gathered = jnp.dot(onehot, tbl, preferred_element_type=jnp.float32,
                       precision=prec)
    out_ref[...] = gathered.astype(out_ref.dtype)


# ----------------------------------------------------------------------------
# Forward wrapper.
# ----------------------------------------------------------------------------
def position_embedding_forward(pos_embed_table, position_ids, *,
                               id_block_size=512,
                               onehot_cap_bytes=2 << 20):
    """Pallas TPU equivalent of PositionEmbedding.forward: pos_embed[position_ids].

    pos_embed_table: (P^2, H) float32 (or bf16)
    position_ids   : int array of any shape
    returns        : position_ids.shape + (H,), same dtype as the table
    """
    p2, hidden = pos_embed_table.shape
    out_dtype = pos_embed_table.dtype
    itemsize = jnp.dtype(out_dtype).itemsize

    ids_flat = jnp.asarray(position_ids, dtype=jnp.int32).reshape(-1)
    n = int(ids_flat.shape[0])

    # Hidden axis: pad to a lane-dense multiple of 128 only when required.
    hp = _round_up(hidden, 128)
    table = pos_embed_table
    if hp != hidden:
        table = jnp.pad(table, ((0, 0), (0, hp - hidden)))

    # Generation-aware VMEM budget (~96 MiB on 128 MiB parts, ~48 MiB on v7x).
    vmem_cap = _vmem_capacity_bytes()
    budget = (vmem_cap * 3) // 4

    # Tile selection: TB ids per block, TH hidden columns per chunk.
    tb = _pick_id_block(n, p2, id_block_size, onehot_cap_bytes)
    th = _pick_hidden_chunk(p2, hp, tb, itemsize, budget)
    while th == 0 and tb > 128:
        tb = max(128, (tb // 2) // 128 * 128)
        th = _pick_hidden_chunk(p2, hp, tb, itemsize, budget)
    if th == 0:
        # TODO(synk): add P2 (row-axis) chunking with in-kernel accumulation for
        # tables too large for even a 128-wide hidden chunk.
        raise ValueError("pos_embed table too large for the available VMEM budget")
    num_h = hp // th

    n_pad = _round_up(n, tb)
    num_b = n_pad // tb
    ids2d = ids_flat if n_pad == n else jnp.pad(ids_flat, (0, n_pad - n))
    ids2d = ids2d.reshape(n_pad, 1)

    # TODO(synk): for n << p2 a direct per-row HBM DMA gather (table with
    # memory_space=pl.ANY + make_async_copy) would avoid loading the table at all.

    def build_and_run(single_buffer_table):
        table_bufs = 1 if (num_h == 1 and single_buffer_table) else 2
        vmem_needed = (table_bufs * p2 * th * itemsize     # resident table / chunk
                       + 2 * tb * th * itemsize            # output block (x2 buffers)
                       + 2 * tb * 4                        # ids block (x2 buffers)
                       + 3 * tb * p2 * 4)                  # one-hot / iota temporaries
        vmem_limit = int(max(32 << 20,
                             min(vmem_needed + (8 << 20), vmem_cap - (8 << 20))))

        if num_h == 1:
            # Whole table resident in VMEM, loaded from HBM once, single-buffered.
            # Id blocks are independent -> "parallel" axis (megacore on v7x).
            grid = (num_b,)
            table_kwargs = ({"pipeline_mode": pl.Buffered(1)}
                            if single_buffer_table else {})
            in_specs = [
                pl.BlockSpec((tb, 1), lambda b: (b, 0)),
                pl.BlockSpec((p2, th), lambda b: (0, 0), **table_kwargs),
            ]
            out_specs = pl.BlockSpec((tb, th), lambda b: (b, 0))
            dims = ("parallel",)
        else:
            # Table too big to be fully resident: chunk the hidden axis (outer)
            # and keep each chunk resident across all id blocks (inner), so every
            # table byte is DMA'd from HBM exactly once; the chunk stays default
            # double-buffered so the chunk-switch DMA overlaps compute.
            # TODO(synk): add a leading core-parallel split of the id range so this
            # chunked path also uses both TensorCores on v7x.
            grid = (num_h, num_b)
            in_specs = [
                pl.BlockSpec((tb, 1), lambda h, b: (b, 0)),
                pl.BlockSpec((p2, th), lambda h, b: (0, h)),
            ]
            out_specs = pl.BlockSpec((tb, th), lambda h, b: (b, h))
            dims = ("arbitrary", "arbitrary")

        return pl.pallas_call(
            _onehot_gather_kernel,
            out_shape=jax.ShapeDtypeStruct((n_pad, hp), out_dtype),
            grid=grid,
            in_specs=in_specs,
            out_specs=out_specs,
            compiler_params=pltpu.CompilerParams(
                dimension_semantics=dims,
                vmem_limit_bytes=vmem_limit,
            ),
        )(ids2d, table)

    try:
        out_padded = build_and_run(single_buffer_table=True)
    except Exception:
        # Fallback for jax builds without BlockSpec(pipeline_mode=...) support.
        out_padded = build_and_run(single_buffer_table=False)

    out = out_padded
    if n_pad != n:
        out = out[:n]
    if hp != hidden:
        out = out[:, :hidden]
    return out.reshape(tuple(position_ids.shape) + (hidden,))


# ----------------------------------------------------------------------------
# Demo / self-check.
# ----------------------------------------------------------------------------
if __name__ == "__main__":
    max_num_patch_per_side = 8   # table has 64 rows
    hidden_size = 32
    batch, seq = 2, 8

    table = make_position_embedding_table(max_num_patch_per_side, hidden_size)

    key = jax.random.PRNGKey(0)
    position_ids = jax.random.randint(
        key, (batch, seq), 0, max_num_patch_per_side ** 2, dtype=jnp.int32
    )

    out = position_embedding_forward(table, position_ids)
    out = jax.block_until_ready(out)

    # Reference: plain JAX gather (same semantics as torch pos_embed[position_ids]).
    ref = jnp.take(table, position_ids, axis=0)
    assert out.shape == (batch, seq, hidden_size)
    assert out.dtype == table.dtype
    # One-hot MXU gather at HIGHEST precision matches the exact gather to <=1 ulp.
    np.testing.assert_allclose(np.asarray(out), np.asarray(ref), rtol=1e-6, atol=1e-6)

    print("KERNEL_OK")
</pallas_src>

<mosaic_0001>
module attributes {stable_mosaic.version = 11 : i64} {
  func.func @_onehot_gather_kernel(%arg0: i32, %arg1: memref<128x1xi32, #tpu.memory_space<vmem>>, %arg2: memref<64x128xf32, #tpu.memory_space<vmem>>, %arg3: memref<128x128xf32, #tpu.memory_space<vmem>>) attributes {dimension_semantics = [#tpu.dimension_semantics<parallel>], iteration_bounds = array<i64: 1>, scalar_prefetch = 0 : i64, scratch_operands = 0 : i64, tpu.core_type = #tpu.core_type<tc>, window_params = [{transform_indices = @transform_0, window_bounds = array<i64: 128, 1>}, {pipeline_mode = #tpu.pipeline_mode<synchronous>, transform_indices = @transform_1, window_bounds = array<i64: 64, 128>}, {transform_indices = @transform_2, window_bounds = array<i64: 128, 128>}]} {
    %c0 = arith.constant 0 : index
    %c0_0 = arith.constant 0 : index
    %0 = vector.load %arg2[%c0, %c0_0] : memref<64x128xf32, #tpu.memory_space<vmem>>, vector<64x128xf32>
    %c0_1 = arith.constant 0 : index
    %c0_2 = arith.constant 0 : index
    %1 = vector.load %arg1[%c0_1, %c0_2] : memref<128x1xi32, #tpu.memory_space<vmem>>, vector<128x1xi32>
    %2 = tpu.iota {dimensions = array<i32: 1>} : vector<128x64xi32>
    %3 = vector.broadcast %1 : vector<128x1xi32> to vector<128x64xi32>
    %4 = arith.cmpi eq, %3, %2 : vector<128x64xi32>
    %5 = arith.extui %4 : vector<128x64xi1> to vector<128x64xi32>
    %6 = arith.sitofp %5 : vector<128x64xi32> to vector<128x64xf32>
    %cst = arith.constant dense<0.000000e+00> : vector<128x128xf32>
    %7 = tpu.matmul %6, %0, %cst {dimension_numbers = #tpu.dot_dimension_numbers<[1], [0], [0], [1], [0, 0, 1, 1], [], []>, precision = #tpu.contract_precision<fp32>} : vector<128x64xf32>, vector<64x128xf32>, vector<128x128xf32> -> vector<128x128xf32>
    %c0_3 = arith.constant 0 : index
    %c0_4 = arith.constant 0 : index
    %8 = vector.load %arg3[%c0_3, %c0_4] : memref<128x128xf32, #tpu.memory_space<vmem>>, vector<128x128xf32>
    tpu.vector_store %arg3[%c0_3, %c0_4], %7 {strides = array<i32>} : memref<128x128xf32, #tpu.memory_space<vmem>>, vector<128x128xf32>,
    return
  }
  func.func @transform_0(%arg0: i32) -> (i32, i32) {
    %c0_i32 = arith.constant 0 : i32
    %c0_i32_0 = arith.constant 0 : i32
    return %arg0, %c0_i32 : i32, i32
  }
  func.func @transform_1(%arg0: i32) -> (i32, i32) {
    %c0_i32 = arith.constant 0 : i32
    %c0_i32_0 = arith.constant 0 : i32
    %c0_i32_1 = arith.constant 0 : i32
    return %c0_i32, %c0_i32_0 : i32, i32
  }
  func.func @transform_2(%arg0: i32) -> (i32, i32) {
    %c0_i32 = arith.constant 0 : i32
    %c0_i32_0 = arith.constant 0 : i32
    return %arg0, %c0_i32 : i32, i32
  }
}

module attributes {stable_mosaic.version = 11 : i64} {
  func.func @_onehot_gather_kernel(%arg0: i32, %arg1: memref<128x1xi32, #tpu.memory_space<vmem>>, %arg2: memref<64x128xf32, #tpu.memory_space<vmem>>, %arg3: memref<128x128xf32, #tpu.memory_space<vmem>>) attributes {dimension_semantics = [#tpu.dimension_semantics<parallel>], iteration_bounds = array<i64: 1>, scalar_prefetch = 0 : i64, scratch_operands = 0 : i64, tpu.core_type = #tpu.core_type<tc>, window_params = [{transform_indices = @transform_0, window_bounds = array<i64: 128, 1>}, {pipeline_mode = #tpu.pipeline_mode<synchronous>, transform_indices = @transform_1, window_bounds = array<i64: 64, 128>}, {transform_indices = @transform_2, window_bounds = array<i64: 128, 128>}]} {
    %c0 = arith.constant 0 : index
    %c0_0 = arith.constant 0 : index
    %0 = vector.load %arg2[%c0, %c0_0] : memref<64x128xf32, #tpu.memory_space<vmem>>, vector<64x128xf32>
    %c0_1 = arith.constant 0 : index
    %c0_2 = arith.constant 0 : index
    %1 = vector.load %arg1[%c0_1, %c0_2] : memref<128x1xi32, #tpu.memory_space<vmem>>, vector<128x1xi32>
    %2 = tpu.iota {dimensions = array<i32: 1>} : vector<128x64xi32>
    %3 = vector.broadcast %1 : vector<128x1xi32> to vector<128x64xi32>
    %4 = arith.cmpi eq, %3, %2 : vector<128x64xi32>
    %5 = arith.extui %4 : vector<128x64xi1> to vector<128x64xi32>
    %6 = arith.sitofp %5 : vector<128x64xi32> to vector<128x64xf32>
    %cst = arith.constant dense<0.000000e+00> : vector<128x128xf32>
    %7 = tpu.matmul %6, %0, %cst {dimension_numbers = #tpu.dot_dimension_numbers<[1], [0], [0], [1], [0, 0, 1, 1], [], []>, precision = #tpu.contract_precision<fp32>} : vector<128x64xf32>, vector<64x128xf32>, vector<128x128xf32> -> vector<128x128xf32>
    %c0_3 = arith.constant 0 : index
    %c0_4 = arith.constant 0 : index
    %8 = vector.load %arg3[%c0_3, %c0_4] : memref<128x128xf32, #tpu.memory_space<vmem>>, vector<128x128xf32>
    tpu.vector_store %arg3[%c0_3, %c0_4], %7 {strides = array<i32>} : memref<128x128xf32, #tpu.memory_space<vmem>>, vector<128x128xf32>,
    return
  }
  func.func @transform_0(%arg0: i32) -> (i32, i32) {
    %c0_i32 = arith.constant 0 : i32
    %c0_i32_0 = arith.constant 0 : i32
    return %arg0, %c0_i32 : i32, i32
  }
  func.func @transform_1(%arg0: i32) -> (i32, i32) {
    %c0_i32 = arith.constant 0 : i32
    %c0_i32_0 = arith.constant 0 : i32
    %c0_i32_1 = arith.constant 0 : i32
    return %c0_i32, %c0_i32_0 : i32, i32
  }
  func.func @transform_2(%arg0: i32) -> (i32, i32) {
    %c0_i32 = arith.constant 0 : i32
    %c0_i32_0 = arith.constant 0 : i32
    return %arg0, %c0_i32 : i32, i32
  }
}

</mosaic_0001>

<llo_original>
// kernel: tpu_custom_call.1
$region0: #{tpu_custom_call.1}
  #allocation0 [shape = 'u32[]', space=smem, size = 0x4, offset = 0x4, fixed_abs, tag = 'smem constant byte address 0x4 - core index']
  #allocation1 [shape = 'u32[72,128]{1,0:T(1,128)}', space=vmem, size = 0x9000, scoped, tag = 'internal scratch']
  %s0 = inlined_call_operand.vmem [shape: s32[128,1], index: 0, kind: input, shape index: {}]
  %s1 = inlined_call_operand.vmem [shape: f32[64,128], index: 1, kind: input, shape index: {}]
  %s2 = inlined_call_operand.hbm [shape: f32[128,128], index: 2, kind: output, shape index: {}]
  %s3 = sld [smem:[#allocation0]]
  $region18: #{tpu_custom_call.1} parent=0
    _
  %s5 = ssub.s32 1, %s3
  %s6 = scalar_select 0, %s5, %s3
  $region1: #{tpu_custom_call.1} parent=0
    #allocation2 [shape = 'u8[65536]{0}', space=vmem, size = 0x10000, scoped, tag = 'output window, operand 0, single buffered']
    #allocation3 [shape = 's32[1]{0}', space=sflag, size = 0x4, scoped, tag = 'scoped memory for tpu_custom_call.1']
    %7 = vsyncpa [#allocation3], 0
    // Predicated region
    $region2: #{tpu_custom_call.1} parent=1 // pred_check
      _
    $region3: #{tpu_custom_call.1} parent=1 // pred_check_branch
      %9 = sbr.rel (0) target = $region5
    $region4: #{tpu_custom_call.1} parent=1 // pred_region
      _
    $region5: #{tpu_custom_call.1} parent=1 // pred_fallthru
      _
    // Predicated region
    $region6: #{tpu_custom_call.1} parent=1 // pred_check
      _
    $region7: #{tpu_custom_call.1} parent=1 // pred_check_branch
      %11 = sbr.rel (0) target = $region9
    $region8: #{tpu_custom_call.1} parent=1 // pred_region
      _
    $region9: #{tpu_custom_call.1} parent=1 // pred_fallthru
      _
    %v12 = vld [vmem:[%s1] sm:$0xff]
    %v13 = vld [vmem:[%s1 + $0x8] sm:$0xff]
    %v14 = vld [vmem:[%s1 + $0x10] sm:$0xff]
    %v15 = vld [vmem:[%s1 + $0x18] sm:$0xff]
    %v16 = vld [vmem:[%s1 + $0x20] sm:$0xff]
    %v17 = vld [vmem:[%s1 + $0x28] sm:$0xff]
    %v18 = vld [vmem:[%s1 + $0x30] sm:$0xff]
    %v19 = vld [vmem:[%s1 + $0x38] sm:$0xff]
    %v20 = vld [vmem:[%s0] sm:$0xff]
    %v21 = vld [vmem:[%s0 + $0x8] sm:$0xff]
    %v22 = vld [vmem:[%s0 + $0x10] sm:$0xff]
    %v23 = vld [vmem:[%s0 + $0x18] sm:$0xff]
    %v24 = vld [vmem:[%s0 + $0x20] sm:$0xff]
    %v25 = vld [vmem:[%s0 + $0x28] sm:$0xff]
    %v26 = vld [vmem:[%s0 + $0x30] sm:$0xff]
    %v27 = vld [vmem:[%s0 + $0x38] sm:$0xff]
    %v28 = vld [vmem:[%s0 + $0x40] sm:$0xff]
    %v29 = vld [vmem:[%s0 + $0x48] sm:$0xff]
    %v30 = vld [vmem:[%s0 + $0x50] sm:$0xff]
    %v31 = vld [vmem:[%s0 + $0x58] sm:$0xff]
    %v32 = vld [vmem:[%s0 + $0x60] sm:$0xff]
    %v33 = vld [vmem:[%s0 + $0x68] sm:$0xff]
    %v34 = vld [vmem:[%s0 + $0x70] sm:$0xff]
    %v35 = vld [vmem:[%s0 + $0x78] sm:$0xff]
    %v36 = vlaneseq
    %v37 = vand.u32 %v36, 127
    %38 = vset.pattern.permute.xlu0 0
    %39 = vperm.xlu0 %38, %v20
    %v40 = vpop.permute.xlu0 %39
    %41 = vset.pattern.permute.xlu0 0
    %42 = vperm.xlu0 %41, %v21
    %v43 = vpop.permute.xlu0 %42
    %44 = vset.pattern.permute.xlu0 0
    %45 = vperm.xlu0 %44, %v22
    %v46 = vpop.permute.xlu0 %45
    %47 = vset.pattern.permute.xlu0 0
    %48 = vperm.xlu0 %47, %v23
    %v49 = vpop.permute.xlu0 %48
    %50 = vset.pattern.permute.xlu0 0
    %51 = vperm.xlu0 %50, %v24
    %v52 = vpop.permute.xlu0 %51
    %53 = vset.pattern.permute.xlu0 0
    %54 = vperm.xlu0 %53, %v25
    %v55 = vpop.permute.xlu0 %54
    %56 = vset.pattern.permute.xlu0 0
    %57 = vperm.xlu0 %56, %v26
    %v58 = vpop.permute.xlu0 %57
    %59 = vset.pattern.permute.xlu0 0
    %60 = vperm.xlu0 %59, %v27
    %v61 = vpop.permute.xlu0 %60
    %62 = vset.pattern.permute.xlu0 0
    %63 = vperm.xlu0 %62, %v28
    %v64 = vpop.permute.xlu0 %63
    %65 = vset.pattern.permute.xlu0 0
    %66 = vperm.xlu0 %65, %v29
    %v67 = vpop.permute.xlu0 %66
    %68 = vset.pattern.permute.xlu0 0
    %69 = vperm.xlu0 %68, %v30
    %v70 = vpop.permute.xlu0 %69
    %71 = vset.pattern.permute.xlu0 0
    %72 = vperm.xlu0 %71, %v31
    %v73 = vpop.permute.xlu0 %72
    %74 = vset.pattern.permute.xlu0 0
    %75 = vperm.xlu0 %74, %v32
    %v76 = vpop.permute.xlu0 %75
    %77 = vset.pattern.permute.xlu0 0
    %78 = vperm.xlu0 %77, %v33
    %v79 = vpop.permute.xlu0 %78
    %80 = vset.pattern.permute.xlu0 0
    %81 = vperm.xlu0 %80, %v34
    %v82 = vpop.permute.xlu0 %81
    %83 = vset.pattern.permute.xlu0 0
    %84 = vperm.xlu0 %83, %v35
    %v85 = vpop.permute.xlu0 %84
    %vm86 = vcmp.eq.s32.totalorder %v40, %v37
    %vm87 = vcmp.eq.s32.totalorder %v43, %v37
    %vm88 = vcmp.eq.s32.totalorder %v46, %v37
    %vm89 = vcmp.eq.s32.totalorder %v49, %v37
    %vm90 = vcmp.eq.s32.totalorder %v52, %v37
    %vm91 = vcmp.eq.s32.totalorder %v55, %v37
    %vm92 = vcmp.eq.s32.totalorder %v58, %v37
    %vm93 = vcmp.eq.s32.totalorder %v61, %v37
    %vm94 = vcmp.eq.s32.totalorder %v64, %v37
    %vm95 = vcmp.eq.s32.totalorder %v67, %v37
    %vm96 = vcmp.eq.s32.totalorder %v70, %v37
    %vm97 = vcmp.eq.s32.totalorder %v73, %v37
    %vm98 = vcmp.eq.s32.totalorder %v76, %v37
    %vm99 = vcmp.eq.s32.totalorder %v79, %v37
    %vm100 = vcmp.eq.s32.totalorder %v82, %v37
    %vm101 = vcmp.eq.s32.totalorder %v85, %v37
    %v102 = vsel %vm86, 1, 0
    %v103 = vsel %vm87, 1, 0
    %v104 = vsel %vm88, 1, 0
    %v105 = vsel %vm89, 1, 0
    %v106 = vsel %vm90, 1, 0
    %v107 = vsel %vm91, 1, 0
    %v108 = vsel %vm92, 1, 0
    %v109 = vsel %vm93, 1, 0
    %v110 = vsel %vm94, 1, 0
    %v111 = vsel %vm95, 1, 0
    %v112 = vsel %vm96, 1, 0
    %v113 = vsel %vm97, 1, 0
    %v114 = vsel %vm98, 1, 0
    %v115 = vsel %vm99, 1, 0
    %v116 = vsel %vm100, 1, 0
    %v117 = vsel %vm101, 1, 0
    %v118 = vcvt.s32.f32 %v102
    %v119 = vcvt.s32.f32 %v103
    %v120 = vcvt.s32.f32 %v104
    %v121 = vcvt.s32.f32 %v105
    %v122 = vcvt.s32.f32 %v106
    %v123 = vcvt.s32.f32 %v107
    %v124 = vcvt.s32.f32 %v108
    %v125 = vcvt.s32.f32 %v109
    %v126 = vcvt.s32.f32 %v110
    %v127 = vcvt.s32.f32 %v111
    %v128 = vcvt.s32.f32 %v112
    %v129 = vcvt.s32.f32 %v113
    %v130 = vcvt.s32.f32 %v114
    %v131 = vcvt.s32.f32 %v115
    %v132 = vcvt.s32.f32 %v116
    %v133 = vcvt.s32.f32 %v117
    %vm134 = vcmask 523264
    %v136 = vsel %vm134, %v118, 0
    %v139 = vsel %vm134, %v119, 0
    %v142 = vsel %vm134, %v120, 0
    %v145 = vsel %vm134, %v121, 0
    %v148 = vsel %vm134, %v122, 0
    %v151 = vsel %vm134, %v123, 0
    %v154 = vsel %vm134, %v124, 0
    %v157 = vsel %vm134, %v125, 0
    %v160 = vsel %vm134, %v126, 0
    %v163 = vsel %vm134, %v127, 0
    %v166 = vsel %vm134, %v128, 0
    %v169 = vsel %vm134, %v129, 0
    %v172 = vsel %vm134, %v130, 0
    %v175 = vsel %vm134, %v131, 0
    %v178 = vsel %vm134, %v132, 0
    %v181 = vsel %vm134, %v133, 0
    %183 = vmatpush.msra.mxu0 0.0
    %184 = vmatpush.msra.mxu0 0.0
    %185 = vmatpush.msra.mxu0 0.0
    %186 = vmatpush.msra.mxu0 0.0
    %187 = vmatpush.msra.mxu0 0.0
    %188 = vmatpush.msra.mxu0 0.0
    %189 = vmatpush.msra.mxu0 0.0
    %190 = vmatpush.msra.mxu0 0.0
    %v191 = vand.u32 %v19, 4294901760
    %192 = vmatpush.msra.mxu0 %v191
    %v193 = vand.u32 %v18, 4294901760
    %194 = vmatpush.msra.mxu0 %v193
    %v195 = vand.u32 %v17, 4294901760
    %196 = vmatpush.msra.mxu0 %v195
    %v197 = vand.u32 %v16, 4294901760
    %198 = vmatpush.msra.mxu0 %v197
    %v199 = vand.u32 %v15, 4294901760
    %200 = vmatpush.msra.mxu0 %v199
    %v201 = vand.u32 %v14, 4294901760
    %202 = vmatpush.msra.mxu0 %v201
    %v203 = vand.u32 %v13, 4294901760
    %204 = vmatpush.msra.mxu0 %v203
    %v205 = vand.u32 %v12, 4294901760
    %206 = vmatpush.msra.mxu0 %v205
    %v207 = vand.u32 %v136, 4294901760
    %v208 = vsub.f32 %v136, %v207
    %v209 = vand.u32 %v208, 4294901760
    %v210 = vsub.f32 %v208, %v209
    %v211 = vand.u32 %v210, 4294901760
    %212 = vmatmul.f32.gmra.mxu0 %v211
    %v213 = vpop.f32.mrf.mxu0
    %v214 = vadd.f32 0.0, %v213
    %v215 = vand.u32 %v139, 4294901760
    %v216 = vsub.f32 %v139, %v215
    %v217 = vand.u32 %v216, 4294901760
    %v218 = vsub.f32 %v216, %v217
    %v219 = vand.u32 %v218, 4294901760
    %220 = vmatmul.f32.gmra.mxu0 %v219
    %v221 = vpop.f32.mrf.mxu0
    %v222 = vadd.f32 0.0, %v221
    %v223 = vand.u32 %v142, 4294901760
    %v224 = vsub.f32 %v142, %v223
    %v225 = vand.u32 %v224, 4294901760
    %v226 = vsub.f32 %v224, %v225
    %v227 = vand.u32 %v226, 4294901760
    %228 = vmatmul.f32.gmra.mxu0 %v227
    %v229 = vpop.f32.mrf.mxu0
    %v230 = vadd.f32 0.0, %v229
    %v231 = vand.u32 %v145, 4294901760
    %v232 = vsub.f32 %v145, %v231
    %v233 = vand.u32 %v232, 4294901760
    %v234 = vsub.f32 %v232, %v233
    %v235 = vand.u32 %v234, 4294901760
    %236 = vmatmul.f32.gmra.mxu0 %v235
    %v237 = vpop.f32.mrf.mxu0
    %v238 = vadd.f32 0.0, %v237
    %v239 = vand.u32 %v148, 4294901760
    %v240 = vsub.f32 %v148, %v239
    %v241 = vand.u32 %v240, 4294901760
    %v242 = vsub.f32 %v240, %v241
    %v243 = vand.u32 %v242, 4294901760
    %244 = vmatmul.f32.gmra.mxu0 %v243
    %v245 = vpop.f32.mrf.mxu0
    %v246 = vadd.f32 0.0, %v245
    %v247 = vand.u32 %v151, 4294901760
    %v248 = vsub.f32 %v151, %v247
    %v249 = vand.u32 %v248, 4294901760
    %v250 = vsub.f32 %v248, %v249
    %v251 = vand.u32 %v250, 4294901760
    %252 = vmatmul.f32.gmra.mxu0 %v251
    %v253 = vpop.f32.mrf.mxu0
    %v254 = vadd.f32 0.0, %v253
    %v255 = vand.u32 %v154, 4294901760
    %v256 = vsub.f32 %v154, %v255
    %v257 = vand.u32 %v256, 4294901760
    %v258 = vsub.f32 %v256, %v257
    %v259 = vand.u32 %v258, 4294901760
    %260 = vmatmul.f32.gmra.mxu0 %v259
    %v261 = vpop.f32.mrf.mxu0
    %v262 = vadd.f32 0.0, %v261
    %v263 = vand.u32 %v157, 4294901760
    %v264 = vsub.f32 %v157, %v263
    %v265 = vand.u32 %v264, 4294901760
    %v266 = vsub.f32 %v264, %v265
    %v267 = vand.u32 %v266, 4294901760
    %268 = vmatmul.f32.gmra.mxu0 %v267
    %v269 = vpop.f32.mrf.mxu0
    %v270 = vadd.f32 0.0, %v269
    %v271 = vand.u32 %v160, 4294901760
    %v272 = vsub.f32 %v160, %v271
    %v273 = vand.u32 %v272, 4294901760
    %v274 = vsub.f32 %v272, %v273
    %v275 = vand.u32 %v274, 4294901760
    %276 = vmatmul.f32.gmra.mxu0 %v275
    %v277 = vpop.f32.mrf.mxu0
    %v278 = vadd.f32 0.0, %v277
    %v279 = vand.u32 %v163, 4294901760
    %v280 = vsub.f32 %v163, %v279
    %v281 = vand.u32 %v280, 4294901760
    %v282 = vsub.f32 %v280, %v281
    %v283 = vand.u32 %v282, 4294901760
    %284 = vmatmul.f32.gmra.mxu0 %v283
    %v285 = vpop.f32.mrf.mxu0
    %v286 = vadd.f32 0.0, %v285
    %v287 = vand.u32 %v166, 4294901760
    %v288 = vsub.f32 %v166, %v287
    %v289 = vand.u32 %v288, 4294901760
    %v290 = vsub.f32 %v288, %v289
    %v291 = vand.u32 %v290, 4294901760
    %292 = vmatmul.f32.gmra.mxu0 %v291
    %v293 = vpop.f32.mrf.mxu0
    %v294 = vadd.f32 0.0, %v293
    %v295 = vand.u32 %v169, 4294901760
    %v296 = vsub.f32 %v169, %v295
    %v297 = vand.u32 %v296, 4294901760
    %v298 = vsub.f32 %v296, %v297
    %v299 = vand.u32 %v298, 4294901760
    %300 = vmatmul.f32.gmra.mxu0 %v299
    %v301 = vpop.f32.mrf.mxu0
    %v302 = vadd.f32 0.0, %v301
    %v303 = vand.u32 %v172, 4294901760
    %v304 = vsub.f32 %v172, %v303
    %v305 = vand.u32 %v304, 4294901760
    %v306 = vsub.f32 %v304, %v305
    %v307 = vand.u32 %v306, 4294901760
    %308 = vmatmul.f32.gmra.mxu0 %v307
    %v309 = vpop.f32.mrf.mxu0
    %v310 = vadd.f32 0.0, %v309
    %v311 = vand.u32 %v175, 4294901760
    %v312 = vsub.f32 %v175, %v311
    %v313 = vand.u32 %v312, 4294901760
    %v314 = vsub.f32 %v312, %v313
    %v315 = vand.u32 %v314, 4294901760
    %316 = vmatmul.f32.gmra.mxu0 %v315
    %v317 = vpop.f32.mrf.mxu0
    %v318 = vadd.f32 0.0, %v317
    %v319 = vand.u32 %v178, 4294901760
    %v320 = vsub.f32 %v178, %v319
    %v321 = vand.u32 %v320, 4294901760
    %v322 = vsub.f32 %v320, %v321
    %v323 = vand.u32 %v322, 4294901760
    %324 = vmatmul.f32.gmra.mxu0 %v323
    %v325 = vpop.f32.mrf.mxu0
    %v326 = vadd.f32 0.0, %v325
    %v327 = vand.u32 %v181, 4294901760
    %v328 = vsub.f32 %v181, %v327
    %v329 = vand.u32 %v328, 4294901760
    %v330 = vsub.f32 %v328, %v329
    %v331 = vand.u32 %v330, 4294901760
    %332 = vmatmul.f32.gmra.mxu0 %v331
    %v333 = vpop.f32.mrf.mxu0
    %v334 = vadd.f32 0.0, %v333
    %335 = vdwg.mxu0
    %336 = vmatpush.msra.mxu0 0.0
    %337 = vmatpush.msra.mxu0 0.0
    %338 = vmatpush.msra.mxu0 0.0
    %339 = vmatpush.msra.mxu0 0.0
    %340 = vmatpush.msra.mxu0 0.0
    %341 = vmatpush.msra.mxu0 0.0
    %342 = vmatpush.msra.mxu0 0.0
    %343 = vmatpush.msra.mxu0 0.0
    %v344 = vand.u32 %v19, 4294901760
    %v345 = vsub.f32 %v19, %v344
    %v346 = vand.u32 %v345, 4294901760
    %v347 = vsub.f32 %v345, %v346
    %v348 = vand.u32 %v347, 4294901760
    %349 = vmatpush.msra.mxu0 %v348
    %v350 = vand.u32 %v18, 4294901760
    %v351 = vsub.f32 %v18, %v350
    %v352 = vand.u32 %v351, 4294901760
    %v353 = vsub.f32 %v351, %v352
    %v354 = vand.u32 %v353, 4294901760
    %355 = vmatpush.msra.mxu0 %v354
    %v356 = vand.u32 %v17, 4294901760
    %v357 = vsub.f32 %v17, %v356
    %v358 = vand.u32 %v357, 4294901760
    %v359 = vsub.f32 %v357, %v358
    %v360 = vand.u32 %v359, 4294901760
    %361 = vmatpush.msra.mxu0 %v360
    %v362 = vand.u32 %v16, 4294901760
    %v363 = vsub.f32 %v16, %v362
    %v364 = vand.u32 %v363, 4294901760
    %v365 = vsub.f32 %v363, %v364
    %v366 = vand.u32 %v365, 4294901760
    %367 = vmatpush.msra.mxu0 %v366
    %v368 = vand.u32 %v15, 4294901760
    %v369 = vsub.f32 %v15, %v368
    %v370 = vand.u32 %v369, 4294901760
    %v371 = vsub.f32 %v369, %v370
    %v372 = vand.u32 %v371, 4294901760
    %373 = vmatpush.msra.mxu0 %v372
    %v374 = vand.u32 %v14, 4294901760
    %v375 = vsub.f32 %v14, %v374
    %v376 = vand.u32 %v375, 4294901760
    %v377 = vsub.f32 %v375, %v376
    %v378 = vand.u32 %v377, 4294901760
    %379 = vmatpush.msra.mxu0 %v378
    %v380 = vand.u32 %v13, 4294901760
    %v381 = vsub.f32 %v13, %v380
    %v382 = vand.u32 %v381, 4294901760
    %v383 = vsub.f32 %v381, %v382
    %v384 = vand.u32 %v383, 4294901760
    %385 = vmatpush.msra.mxu0 %v384
    %v386 = vand.u32 %v12, 4294901760
    %v387 = vsub.f32 %v12, %v386
    %v388 = vand.u32 %v387, 4294901760
    %v389 = vsub.f32 %v387, %v388
    %v390 = vand.u32 %v389, 4294901760
    %391 = vmatpush.msra.mxu0 %v390
    %v392 = vand.u32 %v136, 4294901760
    %393 = vmatmul.f32.gmra.mxu0 %v392
    %v394 = vpop.f32.mrf.mxu0
    %v395 = vadd.f32 %v214, %v394
    %v396 = vand.u32 %v139, 4294901760
    %397 = vmatmul.f32.gmra.mxu0 %v396
    %v398 = vpop.f32.mrf.mxu0
    %v399 = vadd.f32 %v222, %v398
    %v400 = vand.u32 %v142, 4294901760
    %401 = vmatmul.f32.gmra.mxu0 %v400
    %v402 = vpop.f32.mrf.mxu0
    %v403 = vadd.f32 %v230, %v402
    %v404 = vand.u32 %v145, 4294901760
    %405 = vmatmul.f32.gmra.mxu0 %v404
    %v406 = vpop.f32.mrf.mxu0
    %v407 = vadd.f32 %v238, %v406
    %v408 = vand.u32 %v148, 4294901760
    %409 = vmatmul.f32.gmra.mxu0 %v408
    %v410 = vpop.f32.mrf.mxu0
    %v411 = vadd.f32 %v246, %v410
    %v412 = vand.u32 %v151, 4294901760
    %413 = vmatmul.f32.gmra.mxu0 %v412
    %v414 = vpop.f32.mrf.mxu0
    %v415 = vadd.f32 %v254, %v414
    %v416 = vand.u32 %v154, 4294901760
    %417 = vmatmul.f32.gmra.mxu0 %v416
    %v418 = vpop.f32.mrf.mxu0
    %v419 = vadd.f32 %v262, %v418
    %v420 = vand.u32 %v157, 4294901760
    %421 = vmatmul.f32.gmra.mxu0 %v420
    %v422 = vpop.f32.mrf.mxu0
    %v423 = vadd.f32 %v270, %v422
    %v424 = vand.u32 %v160, 4294901760
    %425 = vmatmul.f32.gmra.mxu0 %v424
    %v426 = vpop.f32.mrf.mxu0
    %v427 = vadd.f32 %v278, %v426
    %v428 = vand.u32 %v163, 4294901760
    %429 = vmatmul.f32.gmra.mxu0 %v428
    %v430 = vpop.f32.mrf.mxu0
    %v431 = vadd.f32 %v286, %v430
    %v432 = vand.u32 %v166, 4294901760
    %433 = vmatmul.f32.gmra.mxu0 %v432
    %v434 = vpop.f32.mrf.mxu0
    %v435 = vadd.f32 %v294, %v434
    %v436 = vand.u32 %v169, 4294901760
    %437 = vmatmul.f32.gmra.mxu0 %v436
    %v438 = vpop.f32.mrf.mxu0
    %v439 = vadd.f32 %v302, %v438
    %v440 = vand.u32 %v172, 4294901760
    %441 = vmatmul.f32.gmra.mxu0 %v440
    %v442 = vpop.f32.mrf.mxu0
    %v443 = vadd.f32 %v310, %v442
    %v444 = vand.u32 %v175, 4294901760
    %445 = vmatmul.f32.gmra.mxu0 %v444
    %v446 = vpop.f32.mrf.mxu0
    %v447 = vadd.f32 %v318, %v446
    %v448 = vand.u32 %v178, 4294901760
    %449 = vmatmul.f32.gmra.mxu0 %v448
    %v450 = vpop.f32.mrf.mxu0
    %v451 = vadd.f32 %v326, %v450
    %v452 = vand.u32 %v181, 4294901760
    %453 = vmatmul.f32.gmra.mxu0 %v452
    %v454 = vpop.f32.mrf.mxu0
    %v455 = vadd.f32 %v334, %v454
    %456 = vdwg.mxu0
    %457 = vmatpush.msra.mxu0 0.0
    %458 = vmatpush.msra.mxu0 0.0
    %459 = vmatpush.msra.mxu0 0.0
    %460 = vmatpush.msra.mxu0 0.0
    %461 = vmatpush.msra.mxu0 0.0
    %462 = vmatpush.msra.mxu0 0.0
    %463 = vmatpush.msra.mxu0 0.0
    %464 = vmatpush.msra.mxu0 0.0
    %v465 = vand.u32 %v19, 4294901760
    %v466 = vsub.f32 %v19, %v465
    %467 = vmatpush.msra.mxu0 %v466
    %v468 = vand.u32 %v18, 4294901760
    %v469 = vsub.f32 %v18, %v468
    %470 = vmatpush.msra.mxu0 %v469
    %v471 = vand.u32 %v17, 4294901760
    %v472 = vsub.f32 %v17, %v471
    %473 = vmatpush.msra.mxu0 %v472
    %v474 = vand.u32 %v16, 4294901760
    %v475 = vsub.f32 %v16, %v474
    %476 = vmatpush.msra.mxu0 %v475
    %v477 = vand.u32 %v15, 4294901760
    %v478 = vsub.f32 %v15, %v477
    %479 = vmatpush.msra.mxu0 %v478
    %v480 = vand.u32 %v14, 4294901760
    %v481 = vsub.f32 %v14, %v480
    %482 = vmatpush.msra.mxu0 %v481
    %v483 = vand.u32 %v13, 4294901760
    %v484 = vsub.f32 %v13, %v483
    %485 = vmatpush.msra.mxu0 %v484
    %v486 = vand.u32 %v12, 4294901760
    %v487 = vsub.f32 %v12, %v486
    %488 = vmatpush.msra.mxu0 %v487
    %v489 = vand.u32 %v136, 4294901760
    %v490 = vsub.f32 %v136, %v489
    %491 = vmatmul.f32.gmra.mxu0 %v490
    %v492 = vpop.f32.mrf.mxu0
    %v493 = vadd.f32 %v395, %v492
    %v494 = vand.u32 %v139, 4294901760
    %v495 = vsub.f32 %v139, %v494
    %496 = vmatmul.f32.gmra.mxu0 %v495
    %v497 = vpop.f32.mrf.mxu0
    %v498 = vadd.f32 %v399, %v497
    %v499 = vand.u32 %v142, 4294901760
    %v500 = vsub.f32 %v142, %v499
    %501 = vmatmul.f32.gmra.mxu0 %v500
    %v502 = vpop.f32.mrf.mxu0
    %v503 = vadd.f32 %v403, %v502
    %v504 = vand.u32 %v145, 4294901760
    %v505 = vsub.f32 %v145, %v504
    %506 = vmatmul.f32.gmra.mxu0 %v505
    %v507 = vpop.f32.mrf.mxu0
    %v508 = vadd.f32 %v407, %v507
    %v509 = vand.u32 %v148, 4294901760
    %v510 = vsub.f32 %v148, %v509
    %511 = vmatmul.f32.gmra.mxu0 %v510
    %v512 = vpop.f32.mrf.mxu0
    %v513 = vadd.f32 %v411, %v512
    %v514 = vand.u32 %v151, 4294901760
    %v515 = vsub.f32 %v151, %v514
    %516 = vmatmul.f32.gmra.mxu0 %v515
    %v517 = vpop.f32.mrf.mxu0
    %v518 = vadd.f32 %v415, %v517
    %v519 = vand.u32 %v154, 4294901760
    %v520 = vsub.f32 %v154, %v519
    %521 = vmatmul.f32.gmra.mxu0 %v520
    %v522 = vpop.f32.mrf.mxu0
    %v523 = vadd.f32 %v419, %v522
    %v524 = vand.u32 %v157, 4294901760
    %v525 = vsub.f32 %v157, %v524
    %526 = vmatmul.f32.gmra.mxu0 %v525
    %v527 = vpop.f32.mrf.mxu0
    %v528 = vadd.f32 %v423, %v527
    %v529 = vand.u32 %v160, 4294901760
    %v530 = vsub.f32 %v160, %v529
    %531 = vmatmul.f32.gmra.mxu0 %v530
    %v532 = vpop.f32.mrf.mxu0
    %v533 = vadd.f32 %v427, %v532
    %v534 = vand.u32 %v163, 4294901760
    %v535 = vsub.f32 %v163, %v534
    %536 = vmatmul.f32.gmra.mxu0 %v535
    %v537 = vpop.f32.mrf.mxu0
    %v538 = vadd.f32 %v431, %v537
    %v539 = vand.u32 %v166, 4294901760
    %v540 = vsub.f32 %v166, %v539
    %541 = vmatmul.f32.gmra.mxu0 %v540
    %v542 = vpop.f32.mrf.mxu0
    %v543 = vadd.f32 %v435, %v542
    %v544 = vand.u32 %v169, 4294901760
    %v545 = vsub.f32 %v169, %v544
    %546 = vmatmul.f32.gmra.mxu0 %v545
    %v547 = vpop.f32.mrf.mxu0
    %v548 = vadd.f32 %v439, %v547
    %v549 = vand.u32 %v172, 4294901760
    %v550 = vsub.f32 %v172, %v549
    %551 = vmatmul.f32.gmra.mxu0 %v550
    %v552 = vpop.f32.mrf.mxu0
    %v553 = vadd.f32 %v443, %v552
    %v554 = vand.u32 %v175, 4294901760
    %v555 = vsub.f32 %v175, %v554
    %556 = vmatmul.f32.gmra.mxu0 %v555
    %v557 = vpop.f32.mrf.mxu0
    %v558 = vadd.f32 %v447, %v557
    %v559 = vand.u32 %v178, 4294901760
    %v560 = vsub.f32 %v178, %v559
    %561 = vmatmul.f32.gmra.mxu0 %v560
    %v562 = vpop.f32.mrf.mxu0
    %v563 = vadd.f32 %v451, %v562
    %v564 = vand.u32 %v181, 4294901760
    %v565 = vsub.f32 %v181, %v564
    %566 = vmatmul.f32.gmra.mxu0 %v565
    %v567 = vpop.f32.mrf.mxu0
    %v568 = vadd.f32 %v455, %v567
    %569 = vdwg.mxu0
    %570 = vmatpush.msra.mxu0 0.0
    %571 = vmatpush.msra.mxu0 0.0
    %572 = vmatpush.msra.mxu0 0.0
    %573 = vmatpush.msra.mxu0 0.0
    %574 = vmatpush.msra.mxu0 0.0
    %575 = vmatpush.msra.mxu0 0.0
    %576 = vmatpush.msra.mxu0 0.0
    %577 = vmatpush.msra.mxu0 0.0
    %v578 = vand.u32 %v19, 4294901760
    %579 = vmatpush.msra.mxu0 %v578
    %v580 = vand.u32 %v18, 4294901760
    %581 = vmatpush.msra.mxu0 %v580
    %v582 = vand.u32 %v17, 4294901760
    %583 = vmatpush.msra.mxu0 %v582
    %v584 = vand.u32 %v16, 4294901760
    %585 = vmatpush.msra.mxu0 %v584
    %v586 = vand.u32 %v15, 4294901760
    %587 = vmatpush.msra.mxu0 %v586
    %v588 = vand.u32 %v14, 4294901760
    %589 = vmatpush.msra.mxu0 %v588
    %v590 = vand.u32 %v13, 4294901760
    %591 = vmatpush.msra.mxu0 %v590
    %v592 = vand.u32 %v12, 4294901760
    %593 = vmatpush.msra.mxu0 %v592
    %v594 = vand.u32 %v136, 4294901760
    %v595 = vsub.f32 %v136, %v594
    %v596 = vand.u32 %v595, 4294901760
    %597 = vmatmul.f32.gmra.mxu0 %v596
    %v598 = vpop.f32.mrf.mxu0
    %v599 = vadd.f32 %v493, %v598
    %v600 = vand.u32 %v139, 4294901760
    %v601 = vsub.f32 %v139, %v600
    %v602 = vand.u32 %v601, 4294901760
    %603 = vmatmul.f32.gmra.mxu0 %v602
    %v604 = vpop.f32.mrf.mxu0
    %v605 = vadd.f32 %v498, %v604
    %v606 = vand.u32 %v142, 4294901760
    %v607 = vsub.f32 %v142, %v606
    %v608 = vand.u32 %v607, 4294901760
    %609 = vmatmul.f32.gmra.mxu0 %v608
    %v610 = vpop.f32.mrf.mxu0
    %v611 = vadd.f32 %v503, %v610
    %v612 = vand.u32 %v145, 4294901760
    %v613 = vsub.f32 %v145, %v612
    %v614 = vand.u32 %v613, 4294901760
    %615 = vmatmul.f32.gmra.mxu0 %v614
    %v616 = vpop.f32.mrf.mxu0
    %v617 = vadd.f32 %v508, %v616
    %v618 = vand.u32 %v148, 4294901760
    %v619 = vsub.f32 %v148, %v618
    %v620 = vand.u32 %v619, 4294901760
    %621 = vmatmul.f32.gmra.mxu0 %v620
    %v622 = vpop.f32.mrf.mxu0
    %v623 = vadd.f32 %v513, %v622
    %v624 = vand.u32 %v151, 4294901760
    %v625 = vsub.f32 %v151, %v624
    %v626 = vand.u32 %v625, 4294901760
    %627 = vmatmul.f32.gmra.mxu0 %v626
    %v628 = vpop.f32.mrf.mxu0
    %v629 = vadd.f32 %v518, %v628
    %v630 = vand.u32 %v154, 4294901760
    %v631 = vsub.f32 %v154, %v630
    %v632 = vand.u32 %v631, 4294901760
    %633 = vmatmul.f32.gmra.mxu0 %v632
    %v634 = vpop.f32.mrf.mxu0
    %v635 = vadd.f32 %v523, %v634
    %v636 = vand.u32 %v157, 4294901760
    %v637 = vsub.f32 %v157, %v636
    %v638 = vand.u32 %v637, 4294901760
    %639 = vmatmul.f32.gmra.mxu0 %v638
    %v640 = vpop.f32.mrf.mxu0
    %v641 = vadd.f32 %v528, %v640
    %v642 = vand.u32 %v160, 4294901760
    %v643 = vsub.f32 %v160, %v642
    %v644 = vand.u32 %v643, 4294901760
    %645 = vmatmul.f32.gmra.mxu0 %v644
    %v646 = vpop.f32.mrf.mxu0
    %v647 = vadd.f32 %v533, %v646
    %v648 = vand.u32 %v163, 4294901760
    %v649 = vsub.f32 %v163, %v648
    %v650 = vand.u32 %v649, 4294901760
    %651 = vmatmul.f32.gmra.mxu0 %v650
    %v652 = vpop.f32.mrf.mxu0
    %v653 = vadd.f32 %v538, %v652
    %v654 = vand.u32 %v166, 4294901760
    %v655 = vsub.f32 %v166, %v654
    %v656 = vand.u32 %v655, 4294901760
    %657 = vmatmul.f32.gmra.mxu0 %v656
    %v658 = vpop.f32.mrf.mxu0
    %v659 = vadd.f32 %v543, %v658
    %v660 = vand.u32 %v169, 4294901760
    %v661 = vsub.f32 %v169, %v660
    %v662 = vand.u32 %v661, 4294901760
    %663 = vmatmul.f32.gmra.mxu0 %v662
    %v664 = vpop.f32.mrf.mxu0
    %v665 = vadd.f32 %v548, %v664
    %v666 = vand.u32 %v172, 4294901760
    %v667 = vsub.f32 %v172, %v666
    %v668 = vand.u32 %v667, 4294901760
    %669 = vmatmul.f32.gmra.mxu0 %v668
    %v670 = vpop.f32.mrf.mxu0
    %v671 = vadd.f32 %v553, %v670
    %v672 = vand.u32 %v175, 4294901760
    %v673 = vsub.f32 %v175, %v672
    %v674 = vand.u32 %v673, 4294901760
    %675 = vmatmul.f32.gmra.mxu0 %v674
    %v676 = vpop.f32.mrf.mxu0
    %v677 = vadd.f32 %v558, %v676
    %v678 = vand.u32 %v178, 4294901760
    %v679 = vsub.f32 %v178, %v678
    %v680 = vand.u32 %v679, 4294901760
    %681 = vmatmul.f32.gmra.mxu0 %v680
    %v682 = vpop.f32.mrf.mxu0
    %v683 = vadd.f32 %v563, %v682
    %v684 = vand.u32 %v181, 4294901760
    %v685 = vsub.f32 %v181, %v684
    %v686 = vand.u32 %v685, 4294901760
    %687 = vmatmul.f32.gmra.mxu0 %v686
    %v688 = vpop.f32.mrf.mxu0
    %v689 = vadd.f32 %v568, %v688
    %690 = vdwg.mxu0
    %691 = vmatpush.msra.mxu0 0.0
    %692 = vmatpush.msra.mxu0 0.0
    %693 = vmatpush.msra.mxu0 0.0
    %694 = vmatpush.msra.mxu0 0.0
    %695 = vmatpush.msra.mxu0 0.0
    %696 = vmatpush.msra.mxu0 0.0
    %697 = vmatpush.msra.mxu0 0.0
    %698 = vmatpush.msra.mxu0 0.0
    %v699 = vand.u32 %v19, 4294901760
    %v700 = vsub.f32 %v19, %v699
    %v701 = vand.u32 %v700, 4294901760
    %702 = vmatpush.msra.mxu0 %v701
    %v703 = vand.u32 %v18, 4294901760
    %v704 = vsub.f32 %v18, %v703
    %v705 = vand.u32 %v704, 4294901760
    %706 = vmatpush.msra.mxu0 %v705
    %v707 = vand.u32 %v17, 4294901760
    %v708 = vsub.f32 %v17, %v707
    %v709 = vand.u32 %v708, 4294901760
    %710 = vmatpush.msra.mxu0 %v709
    %v711 = vand.u32 %v16, 4294901760
    %v712 = vsub.f32 %v16, %v711
    %v713 = vand.u32 %v712, 4294901760
    %714 = vmatpush.msra.mxu0 %v713
    %v715 = vand.u32 %v15, 4294901760
    %v716 = vsub.f32 %v15, %v715
    %v717 = vand.u32 %v716, 4294901760
    %718 = vmatpush.msra.mxu0 %v717
    %v719 = vand.u32 %v14, 4294901760
    %v720 = vsub.f32 %v14, %v719
    %v721 = vand.u32 %v720, 4294901760
    %722 = vmatpush.msra.mxu0 %v721
    %v723 = vand.u32 %v13, 4294901760
    %v724 = vsub.f32 %v13, %v723
    %v725 = vand.u32 %v724, 4294901760
    %726 = vmatpush.msra.mxu0 %v725
    %v727 = vand.u32 %v12, 4294901760
    %v728 = vsub.f32 %v12, %v727
    %v729 = vand.u32 %v728, 4294901760
    %730 = vmatpush.msra.mxu0 %v729
    %v731 = vand.u32 %v136, 4294901760
    %732 = vmatmul.f32.gmra.mxu0 %v731
    %v733 = vpop.f32.mrf.mxu0
    %v734 = vadd.f32 %v599, %v733
    %v735 = vand.u32 %v139, 4294901760
    %736 = vmatmul.f32.gmra.mxu0 %v735
    %v737 = vpop.f32.mrf.mxu0
    %v738 = vadd.f32 %v605, %v737
    %v739 = vand.u32 %v142, 4294901760
    %740 = vmatmul.f32.gmra.mxu0 %v739
    %v741 = vpop.f32.mrf.mxu0
    %v742 = vadd.f32 %v611, %v741
    %v743 = vand.u32 %v145, 4294901760
    %744 = vmatmul.f32.gmra.mxu0 %v743
    %v745 = vpop.f32.mrf.mxu0
    %v746 = vadd.f32 %v617, %v745
    %v747 = vand.u32 %v148, 4294901760
    %748 = vmatmul.f32.gmra.mxu0 %v747
    %v749 = vpop.f32.mrf.mxu0
    %v750 = vadd.f32 %v623, %v749
    %v751 = vand.u32 %v151, 4294901760
    %752 = vmatmul.f32.gmra.mxu0 %v751
    %v753 = vpop.f32.mrf.mxu0
    %v754 = vadd.f32 %v629, %v753
    %v755 = vand.u32 %v154, 4294901760
    %756 = vmatmul.f32.gmra.mxu0 %v755
    %v757 = vpop.f32.mrf.mxu0
    %v758 = vadd.f32 %v635, %v757
    %v759 = vand.u32 %v157, 4294901760
    %760 = vmatmul.f32.gmra.mxu0 %v759
    %v761 = vpop.f32.mrf.mxu0
    %v762 = vadd.f32 %v641, %v761
    %v763 = vand.u32 %v160, 4294901760
    %764 = vmatmul.f32.gmra.mxu0 %v763
    %v765 = vpop.f32.mrf.mxu0
    %v766 = vadd.f32 %v647, %v765
    %v767 = vand.u32 %v163, 4294901760
    %768 = vmatmul.f32.gmra.mxu0 %v767
    %v769 = vpop.f32.mrf.mxu0
    %v770 = vadd.f32 %v653, %v769
    %v771 = vand.u32 %v166, 4294901760
    %772 = vmatmul.f32.gmra.mxu0 %v771
    %v773 = vpop.f32.mrf.mxu0
    %v774 = vadd.f32 %v659, %v773
    %v775 = vand.u32 %v169, 4294901760
    %776 = vmatmul.f32.gmra.mxu0 %v775
    %v777 = vpop.f32.mrf.mxu0
    %v778 = vadd.f32 %v665, %v777
    %v779 = vand.u32 %v172, 4294901760
    %780 = vmatmul.f32.gmra.mxu0 %v779
    %v781 = vpop.f32.mrf.mxu0
    %v782 = vadd.f32 %v671, %v781
    %v783 = vand.u32 %v175, 4294901760
    %784 = vmatmul.f32.gmra.mxu0 %v783
    %v785 = vpop.f32.mrf.mxu0
    %v786 = vadd.f32 %v677, %v785
    %v787 = vand.u32 %v178, 4294901760
    %788 = vmatmul.f32.gmra.mxu0 %v787
    %v789 = vpop.f32.mrf.mxu0
    %v790 = vadd.f32 %v683, %v789
    %v791 = vand.u32 %v181, 4294901760
    %792 = vmatmul.f32.gmra.mxu0 %v791
    %v793 = vpop.f32.mrf.mxu0
    %v794 = vadd.f32 %v689, %v793
    %795 = vdwg.mxu0
    %796 = vmatpush.msra.mxu0 0.0
    %797 = vmatpush.msra.mxu0 0.0
    %798 = vmatpush.msra.mxu0 0.0
    %799 = vmatpush.msra.mxu0 0.0
    %800 = vmatpush.msra.mxu0 0.0
    %801 = vmatpush.msra.mxu0 0.0
    %802 = vmatpush.msra.mxu0 0.0
    %803 = vmatpush.msra.mxu0 0.0
    %v804 = vand.u32 %v19, 4294901760
    %805 = vmatpush.msra.mxu0 %v804
    %v806 = vand.u32 %v18, 4294901760
    %807 = vmatpush.msra.mxu0 %v806
    %v808 = vand.u32 %v17, 4294901760
    %809 = vmatpush.msra.mxu0 %v808
    %v810 = vand.u32 %v16, 4294901760
    %811 = vmatpush.msra.mxu0 %v810
    %v812 = vand.u32 %v15, 4294901760
    %813 = vmatpush.msra.mxu0 %v812
    %v814 = vand.u32 %v14, 4294901760
    %815 = vmatpush.msra.mxu0 %v814
    %v816 = vand.u32 %v13, 4294901760
    %817 = vmatpush.msra.mxu0 %v816
    %v818 = vand.u32 %v12, 4294901760
    %819 = vmatpush.msra.mxu0 %v818
    %v820 = vand.u32 %v136, 4294901760
    %821 = vmatmul.f32.gmra.mxu0 %v820
    %v822 = vpop.f32.mrf.mxu0
    %v823 = vadd.f32 %v734, %v822
    %v824 = vand.u32 %v139, 4294901760
    %825 = vmatmul.f32.gmra.mxu0 %v824
    %v826 = vpop.f32.mrf.mxu0
    %v827 = vadd.f32 %v738, %v826
    %v828 = vand.u32 %v142, 4294901760
    %829 = vmatmul.f32.gmra.mxu0 %v828
    %v830 = vpop.f32.mrf.mxu0
    %v831 = vadd.f32 %v742, %v830
    %v832 = vand.u32 %v145, 4294901760
    %833 = vmatmul.f32.gmra.mxu0 %v832
    %v834 = vpop.f32.mrf.mxu0
    %v835 = vadd.f32 %v746, %v834
    %v836 = vand.u32 %v148, 4294901760
    %837 = vmatmul.f32.gmra.mxu0 %v836
    %v838 = vpop.f32.mrf.mxu0
    %v839 = vadd.f32 %v750, %v838
    %v840 = vand.u32 %v151, 4294901760
    %841 = vmatmul.f32.gmra.mxu0 %v840
    %v842 = vpop.f32.mrf.mxu0
    %v843 = vadd.f32 %v754, %v842
    %v844 = vand.u32 %v154, 4294901760
    %845 = vmatmul.f32.gmra.mxu0 %v844
    %v846 = vpop.f32.mrf.mxu0
    %v847 = vadd.f32 %v758, %v846
    %v848 = vand.u32 %v157, 4294901760
    %849 = vmatmul.f32.gmra.mxu0 %v848
    %v850 = vpop.f32.mrf.mxu0
    %v851 = vadd.f32 %v762, %v850
    %v852 = vand.u32 %v160, 4294901760
    %853 = vmatmul.f32.gmra.mxu0 %v852
    %v854 = vpop.f32.mrf.mxu0
    %v855 = vadd.f32 %v766, %v854
    %v856 = vand.u32 %v163, 4294901760
    %857 = vmatmul.f32.gmra.mxu0 %v856
    %v858 = vpop.f32.mrf.mxu0
    %v859 = vadd.f32 %v770, %v858
    %v860 = vand.u32 %v166, 4294901760
    %861 = vmatmul.f32.gmra.mxu0 %v860
    %v862 = vpop.f32.mrf.mxu0
    %v863 = vadd.f32 %v774, %v862
    %v864 = vand.u32 %v169, 4294901760
    %865 = vmatmul.f32.gmra.mxu0 %v864
    %v866 = vpop.f32.mrf.mxu0
    %v867 = vadd.f32 %v778, %v866
    %v868 = vand.u32 %v172, 4294901760
    %869 = vmatmul.f32.gmra.mxu0 %v868
    %v870 = vpop.f32.mrf.mxu0
    %v871 = vadd.f32 %v782, %v870
    %v872 = vand.u32 %v175, 4294901760
    %873 = vmatmul.f32.gmra.mxu0 %v872
    %v874 = vpop.f32.mrf.mxu0
    %v875 = vadd.f32 %v786, %v874
    %v876 = vand.u32 %v178, 4294901760
    %877 = vmatmul.f32.gmra.mxu0 %v876
    %v878 = vpop.f32.mrf.mxu0
    %v879 = vadd.f32 %v790, %v878
    %v880 = vand.u32 %v181, 4294901760
    %881 = vmatmul.f32.gmra.mxu0 %v880
    %v882 = vpop.f32.mrf.mxu0
    %v883 = vadd.f32 %v794, %v882
    %884 = vdwg.mxu0
    %885 = vst [vmem:[#allocation2] sm:$0xff] %v823
    %886 = vst [vmem:[#allocation2 + $0x8] sm:$0xff] %v827
    %887 = vst [vmem:[#allocation2 + $0x10] sm:$0xff] %v831
    %888 = vst [vmem:[#allocation2 + $0x18] sm:$0xff] %v835
    %889 = vst [vmem:[#allocation2 + $0x20] sm:$0xff] %v839
    %890 = vst [vmem:[#allocation2 + $0x28] sm:$0xff] %v843
    %891 = vst [vmem:[#allocation2 + $0x30] sm:$0xff] %v847
    %892 = vst [vmem:[#allocation2 + $0x38] sm:$0xff] %v851
    %893 = vst [vmem:[#allocation2 + $0x40] sm:$0xff] %v855
    %894 = vst [vmem:[#allocation2 + $0x48] sm:$0xff] %v859
    %895 = vst [vmem:[#allocation2 + $0x50] sm:$0xff] %v863
    %896 = vst [vmem:[#allocation2 + $0x58] sm:$0xff] %v867
    %897 = vst [vmem:[#allocation2 + $0x60] sm:$0xff] %v871
    %898 = vst [vmem:[#allocation2 + $0x68] sm:$0xff] %v875
    %899 = vst [vmem:[#allocation2 + $0x70] sm:$0xff] %v879
    %900 = vst [vmem:[#allocation2 + $0x78] sm:$0xff] %v883
    // Predicated region
    $region10: #{tpu_custom_call.1} parent=1 // pred_check
      _
    $region11: #{tpu_custom_call.1} parent=1 // pred_check_branch
      %902 = sbr.rel (0) target = $region13
    $region12: #{tpu_custom_call.1} parent=1 // pred_region
      %904 = vsyncadd [#allocation3], 0
      %s905 = sshll.u32 [#allocation2], 4
      %s906 = int_to_ptr.vmem [resolvable:$true] %s905
      %s907 = sshll.u32 %s2, 4
      %s908 = int_to_ptr.hbm [resolvable:$true] %s907
      %913 = dma.vmem_to_hbm [thread:$0]  %s906, 2048, %s908, [#allocation3], 128, 128, 8
    $region13: #{tpu_custom_call.1} parent=1 // pred_fallthru
      _
    // Predicated region
    $region14: #{tpu_custom_call.1} parent=1 // pred_check
      _
    $region15: #{tpu_custom_call.1} parent=1 // pred_check_branch
      %915 = sbr.rel (0) target = $region17
    $region16: #{tpu_custom_call.1} parent=1 // pred_region
      %917 = dma.done [#allocation3], 2048
    $region17: #{tpu_custom_call.1} parent=1 // pred_fallthru
      _
    %918 = vsyncpa [#allocation3], 1

// kernel: tpu_custom_call.1
$region0: #{tpu_custom_call.1}
  #allocation0 [shape = 'u32[]', space=smem, size = 0x4, offset = 0x4, fixed_abs, tag = 'smem constant byte address 0x4 - core index']
  #allocation1 [shape = 'u32[72,128]{1,0:T(1,128)}', space=vmem, size = 0x9000, scoped, tag = 'internal scratch']
  %s0 = inlined_call_operand.vmem [shape: s32[128,1], index: 0, kind: input, shape index: {}]
  %s1 = inlined_call_operand.vmem [shape: f32[64,128], index: 1, kind: input, shape index: {}]
  %s2 = inlined_call_operand.hbm [shape: f32[128,128], index: 2, kind: output, shape index: {}]
  %s3 = sld [smem:[#allocation0]]
  $region18: #{tpu_custom_call.1} parent=0
    _
  %s5 = ssub.s32 1, %s3
  %s6 = scalar_select 0, %s5, %s3
  $region1: #{tpu_custom_call.1} parent=0
    #allocation2 [shape = 'u8[65536]{0}', space=vmem, size = 0x10000, scoped, tag = 'output window, operand 0, single buffered']
    #allocation3 [shape = 's32[1]{0}', space=sflag, size = 0x4, scoped, tag = 'scoped memory for tpu_custom_call.1']
    %7 = vsyncpa [#allocation3], 0
    // Predicated region
    $region2: #{tpu_custom_call.1} parent=1 // pred_check
      _
    $region3: #{tpu_custom_call.1} parent=1 // pred_check_branch
      %9 = sbr.rel (0) target = $region5
    $region4: #{tpu_custom_call.1} parent=1 // pred_region
      _
    $region5: #{tpu_custom_call.1} parent=1 // pred_fallthru
      _
    // Predicated region
    $region6: #{tpu_custom_call.1} parent=1 // pred_check
      _
    $region7: #{tpu_custom_call.1} parent=1 // pred_check_branch
      %11 = sbr.rel (0) target = $region9
    $region8: #{tpu_custom_call.1} parent=1 // pred_region
      _
    $region9: #{tpu_custom_call.1} parent=1 // pred_fallthru
      _
    %v12 = vld [vmem:[%s1] sm:$0xff]
    %v13 = vld [vmem:[%s1 + $0x8] sm:$0xff]
    %v14 = vld [vmem:[%s1 + $0x10] sm:$0xff]
    %v15 = vld [vmem:[%s1 + $0x18] sm:$0xff]
    %v16 = vld [vmem:[%s1 + $0x20] sm:$0xff]
    %v17 = vld [vmem:[%s1 + $0x28] sm:$0xff]
    %v18 = vld [vmem:[%s1 + $0x30] sm:$0xff]
    %v19 = vld [vmem:[%s1 + $0x38] sm:$0xff]
    %v20 = vld [vmem:[%s0] sm:$0xff]
    %v21 = vld [vmem:[%s0 + $0x8] sm:$0xff]
    %v22 = vld [vmem:[%s0 + $0x10] sm:$0xff]
    %v23 = vld [vmem:[%s0 + $0x18] sm:$0xff]
    %v24 = vld [vmem:[%s0 + $0x20] sm:$0xff]
    %v25 = vld [vmem:[%s0 + $0x28] sm:$0xff]
    %v26 = vld [vmem:[%s0 + $0x30] sm:$0xff]
    %v27 = vld [vmem:[%s0 + $0x38] sm:$0xff]
    %v28 = vld [vmem:[%s0 + $0x40] sm:$0xff]
    %v29 = vld [vmem:[%s0 + $0x48] sm:$0xff]
    %v30 = vld [vmem:[%s0 + $0x50] sm:$0xff]
    %v31 = vld [vmem:[%s0 + $0x58] sm:$0xff]
    %v32 = vld [vmem:[%s0 + $0x60] sm:$0xff]
    %v33 = vld [vmem:[%s0 + $0x68] sm:$0xff]
    %v34 = vld [vmem:[%s0 + $0x70] sm:$0xff]
    %v35 = vld [vmem:[%s0 + $0x78] sm:$0xff]
    %v36 = vlaneseq
    %v37 = vand.u32 %v36, 127
    %38 = vset.pattern.permute.xlu0 0
    %39 = vperm.xlu0 %38, %v20
    %v40 = vpop.permute.xlu0 %39
    %41 = vset.pattern.permute.xlu0 0
    %42 = vperm.xlu0 %41, %v21
    %v43 = vpop.permute.xlu0 %42
    %44 = vset.pattern.permute.xlu0 0
    %45 = vperm.xlu0 %44, %v22
    %v46 = vpop.permute.xlu0 %45
    %47 = vset.pattern.permute.xlu0 0
    %48 = vperm.xlu0 %47, %v23
    %v49 = vpop.permute.xlu0 %48
    %50 = vset.pattern.permute.xlu0 0
    %51 = vperm.xlu0 %50, %v24
    %v52 = vpop.permute.xlu0 %51
    %53 = vset.pattern.permute.xlu0 0
    %54 = vperm.xlu0 %53, %v25
    %v55 = vpop.permute.xlu0 %54
    %56 = vset.pattern.permute.xlu0 0
    %57 = vperm.xlu0 %56, %v26
    %v58 = vpop.permute.xlu0 %57
    %59 = vset.pattern.permute.xlu0 0
    %60 = vperm.xlu0 %59, %v27
    %v61 = vpop.permute.xlu0 %60
    %62 = vset.pattern.permute.xlu0 0
    %63 = vperm.xlu0 %62, %v28
    %v64 = vpop.permute.xlu0 %63
    %65 = vset.pattern.permute.xlu0 0
    %66 = vperm.xlu0 %65, %v29
    %v67 = vpop.permute.xlu0 %66
    %68 = vset.pattern.permute.xlu0 0
    %69 = vperm.xlu0 %68, %v30
    %v70 = vpop.permute.xlu0 %69
    %71 = vset.pattern.permute.xlu0 0
    %72 = vperm.xlu0 %71, %v31
    %v73 = vpop.permute.xlu0 %72
    %74 = vset.pattern.permute.xlu0 0
    %75 = vperm.xlu0 %74, %v32
    %v76 = vpop.permute.xlu0 %75
    %77 = vset.pattern.permute.xlu0 0
    %78 = vperm.xlu0 %77, %v33
    %v79 = vpop.permute.xlu0 %78
    %80 = vset.pattern.permute.xlu0 0
    %81 = vperm.xlu0 %80, %v34
    %v82 = vpop.permute.xlu0 %81
    %83 = vset.pattern.permute.xlu0 0
    %84 = vperm.xlu0 %83, %v35
    %v85 = vpop.permute.xlu0 %84
    %vm86 = vcmp.eq.s32.totalorder %v40, %v37
    %vm87 = vcmp.eq.s32.totalorder %v43, %v37
    %vm88 = vcmp.eq.s32.totalorder %v46, %v37
    %vm89 = vcmp.eq.s32.totalorder %v49, %v37
    %vm90 = vcmp.eq.s32.totalorder %v52, %v37
    %vm91 = vcmp.eq.s32.totalorder %v55, %v37
    %vm92 = vcmp.eq.s32.totalorder %v58, %v37
    %vm93 = vcmp.eq.s32.totalorder %v61, %v37
    %vm94 = vcmp.eq.s32.totalorder %v64, %v37
    %vm95 = vcmp.eq.s32.totalorder %v67, %v37
    %vm96 = vcmp.eq.s32.totalorder %v70, %v37
    %vm97 = vcmp.eq.s32.totalorder %v73, %v37
    %vm98 = vcmp.eq.s32.totalorder %v76, %v37
    %vm99 = vcmp.eq.s32.totalorder %v79, %v37
    %vm100 = vcmp.eq.s32.totalorder %v82, %v37
    %vm101 = vcmp.eq.s32.totalorder %v85, %v37
    %v102 = vsel %vm86, 1, 0
    %v103 = vsel %vm87, 1, 0
    %v104 = vsel %vm88, 1, 0
    %v105 = vsel %vm89, 1, 0
    %v106 = vsel %vm90, 1, 0
    %v107 = vsel %vm91, 1, 0
    %v108 = vsel %vm92, 1, 0
    %v109 = vsel %vm93, 1, 0
    %v110 = vsel %vm94, 1, 0
    %v111 = vsel %vm95, 1, 0
    %v112 = vsel %vm96, 1, 0
    %v113 = vsel %vm97, 1, 0
    %v114 = vsel %vm98, 1, 0
    %v115 = vsel %vm99, 1, 0
    %v116 = vsel %vm100, 1, 0
    %v117 = vsel %vm101, 1, 0
    %v118 = vcvt.s32.f32 %v102
    %v119 = vcvt.s32.f32 %v103
    %v120 = vcvt.s32.f32 %v104
    %v121 = vcvt.s32.f32 %v105
    %v122 = vcvt.s32.f32 %v106
    %v123 = vcvt.s32.f32 %v107
    %v124 = vcvt.s32.f32 %v108
    %v125 = vcvt.s32.f32 %v109
    %v126 = vcvt.s32.f32 %v110
    %v127 = vcvt.s32.f32 %v111
    %v128 = vcvt.s32.f32 %v112
    %v129 = vcvt.s32.f32 %v113
    %v130 = vcvt.s32.f32 %v114
    %v131 = vcvt.s32.f32 %v115
    %v132 = vcvt.s32.f32 %v116
    %v133 = vcvt.s32.f32 %v117
    %vm134 = vcmask 523264
    %v136 = vsel %vm134, %v118, 0
    %v139 = vsel %vm134, %v119, 0
    %v142 = vsel %vm134, %v120, 0
    %v145 = vsel %vm134, %v121, 0
    %v148 = vsel %vm134, %v122, 0
    %v151 = vsel %vm134, %v123, 0
    %v154 = vsel %vm134, %v124, 0
    %v157 = vsel %vm134, %v125, 0
    %v160 = vsel %vm134, %v126, 0
    %v163 = vsel %vm134, %v127, 0
    %v166 = vsel %vm134, %v128, 0
    %v169 = vsel %vm134, %v129, 0
    %v172 = vsel %vm134, %v130, 0
    %v175 = vsel %vm134, %v131, 0
    %v178 = vsel %vm134, %v132, 0
    %v181 = vsel %vm134, %v133, 0
    %183 = vmatpush.msra.mxu0 0.0
    %184 = vmatpush.msra.mxu0 0.0
    %185 = vmatpush.msra.mxu0 0.0
    %186 = vmatpush.msra.mxu0 0.0
    %187 = vmatpush.msra.mxu0 0.0
    %188 = vmatpush.msra.mxu0 0.0
    %189 = vmatpush.msra.mxu0 0.0
    %190 = vmatpush.msra.mxu0 0.0
    %v191 = vand.u32 %v19, 4294901760
    %192 = vmatpush.msra.mxu0 %v191
    %v193 = vand.u32 %v18, 4294901760
    %194 = vmatpush.msra.mxu0 %v193
    %v195 = vand.u32 %v17, 4294901760
    %196 = vmatpush.msra.mxu0 %v195
    %v197 = vand.u32 %v16, 4294901760
    %198 = vmatpush.msra.mxu0 %v197
    %v199 = vand.u32 %v15, 4294901760
    %200 = vmatpush.msra.mxu0 %v199
    %v201 = vand.u32 %v14, 4294901760
    %202 = vmatpush.msra.mxu0 %v201
    %v203 = vand.u32 %v13, 4294901760
    %204 = vmatpush.msra.mxu0 %v203
    %v205 = vand.u32 %v12, 4294901760
    %206 = vmatpush.msra.mxu0 %v205
    %v207 = vand.u32 %v136, 4294901760
    %v208 = vsub.f32 %v136, %v207
    %v209 = vand.u32 %v208, 4294901760
    %v210 = vsub.f32 %v208, %v209
    %v211 = vand.u32 %v210, 4294901760
    %212 = vmatmul.f32.gmra.mxu0 %v211
    %v213 = vpop.f32.mrf.mxu0
    %v214 = vadd.f32 0.0, %v213
    %v215 = vand.u32 %v139, 4294901760
    %v216 = vsub.f32 %v139, %v215
    %v217 = vand.u32 %v216, 4294901760
    %v218 = vsub.f32 %v216, %v217
    %v219 = vand.u32 %v218, 4294901760
    %220 = vmatmul.f32.gmra.mxu0 %v219
    %v221 = vpop.f32.mrf.mxu0
    %v222 = vadd.f32 0.0, %v221
    %v223 = vand.u32 %v142, 4294901760
    %v224 = vsub.f32 %v142, %v223
    %v225 = vand.u32 %v224, 4294901760
    %v226 = vsub.f32 %v224, %v225
    %v227 = vand.u32 %v226, 4294901760
    %228 = vmatmul.f32.gmra.mxu0 %v227
    %v229 = vpop.f32.mrf.mxu0
    %v230 = vadd.f32 0.0, %v229
    %v231 = vand.u32 %v145, 4294901760
    %v232 = vsub.f32 %v145, %v231
    %v233 = vand.u32 %v232, 4294901760
    %v234 = vsub.f32 %v232, %v233
    %v235 = vand.u32 %v234, 4294901760
    %236 = vmatmul.f32.gmra.mxu0 %v235
    %v237 = vpop.f32.mrf.mxu0
    %v238 = vadd.f32 0.0, %v237
    %v239 = vand.u32 %v148, 4294901760
    %v240 = vsub.f32 %v148, %v239
    %v241 = vand.u32 %v240, 4294901760
    %v242 = vsub.f32 %v240, %v241
    %v243 = vand.u32 %v242, 4294901760
    %244 = vmatmul.f32.gmra.mxu0 %v243
    %v245 = vpop.f32.mrf.mxu0
    %v246 = vadd.f32 0.0, %v245
    %v247 = vand.u32 %v151, 4294901760
    %v248 = vsub.f32 %v151, %v247
    %v249 = vand.u32 %v248, 4294901760
    %v250 = vsub.f32 %v248, %v249
    %v251 = vand.u32 %v250, 4294901760
    %252 = vmatmul.f32.gmra.mxu0 %v251
    %v253 = vpop.f32.mrf.mxu0
    %v254 = vadd.f32 0.0, %v253
    %v255 = vand.u32 %v154, 4294901760
    %v256 = vsub.f32 %v154, %v255
    %v257 = vand.u32 %v256, 4294901760
    %v258 = vsub.f32 %v256, %v257
    %v259 = vand.u32 %v258, 4294901760
    %260 = vmatmul.f32.gmra.mxu0 %v259
    %v261 = vpop.f32.mrf.mxu0
    %v262 = vadd.f32 0.0, %v261
    %v263 = vand.u32 %v157, 4294901760
    %v264 = vsub.f32 %v157, %v263
    %v265 = vand.u32 %v264, 4294901760
    %v266 = vsub.f32 %v264, %v265
    %v267 = vand.u32 %v266, 4294901760
    %268 = vmatmul.f32.gmra.mxu0 %v267
    %v269 = vpop.f32.mrf.mxu0
    %v270 = vadd.f32 0.0, %v269
    %v271 = vand.u32 %v160, 4294901760
    %v272 = vsub.f32 %v160, %v271
    %v273 = vand.u32 %v272, 4294901760
    %v274 = vsub.f32 %v272, %v273
    %v275 = vand.u32 %v274, 4294901760
    %276 = vmatmul.f32.gmra.mxu0 %v275
    %v277 = vpop.f32.mrf.mxu0
    %v278 = vadd.f32 0.0, %v277
    %v279 = vand.u32 %v163, 4294901760
    %v280 = vsub.f32 %v163, %v279
    %v281 = vand.u32 %v280, 4294901760
    %v282 = vsub.f32 %v280, %v281
    %v283 = vand.u32 %v282, 4294901760
    %284 = vmatmul.f32.gmra.mxu0 %v283
    %v285 = vpop.f32.mrf.mxu0
    %v286 = vadd.f32 0.0, %v285
    %v287 = vand.u32 %v166, 4294901760
    %v288 = vsub.f32 %v166, %v287
    %v289 = vand.u32 %v288, 4294901760
    %v290 = vsub.f32 %v288, %v289
    %v291 = vand.u32 %v290, 4294901760
    %292 = vmatmul.f32.gmra.mxu0 %v291
    %v293 = vpop.f32.mrf.mxu0
    %v294 = vadd.f32 0.0, %v293
    %v295 = vand.u32 %v169, 4294901760
    %v296 = vsub.f32 %v169, %v295
    %v297 = vand.u32 %v296, 4294901760
    %v298 = vsub.f32 %v296, %v297
    %v299 = vand.u32 %v298, 4294901760
    %300 = vmatmul.f32.gmra.mxu0 %v299
    %v301 = vpop.f32.mrf.mxu0
    %v302 = vadd.f32 0.0, %v301
    %v303 = vand.u32 %v172, 4294901760
    %v304 = vsub.f32 %v172, %v303
    %v305 = vand.u32 %v304, 4294901760
    %v306 = vsub.f32 %v304, %v305
    %v307 = vand.u32 %v306, 4294901760
    %308 = vmatmul.f32.gmra.mxu0 %v307
    %v309 = vpop.f32.mrf.mxu0
    %v310 = vadd.f32 0.0, %v309
    %v311 = vand.u32 %v175, 4294901760
    %v312 = vsub.f32 %v175, %v311
    %v313 = vand.u32 %v312, 4294901760
    %v314 = vsub.f32 %v312, %v313
    %v315 = vand.u32 %v314, 4294901760
    %316 = vmatmul.f32.gmra.mxu0 %v315
    %v317 = vpop.f32.mrf.mxu0
    %v318 = vadd.f32 0.0, %v317
    %v319 = vand.u32 %v178, 4294901760
    %v320 = vsub.f32 %v178, %v319
    %v321 = vand.u32 %v320, 4294901760
    %v322 = vsub.f32 %v320, %v321
    %v323 = vand.u32 %v322, 4294901760
    %324 = vmatmul.f32.gmra.mxu0 %v323
    %v325 = vpop.f32.mrf.mxu0
    %v326 = vadd.f32 0.0, %v325
    %v327 = vand.u32 %v181, 4294901760
    %v328 = vsub.f32 %v181, %v327
    %v329 = vand.u32 %v328, 4294901760
    %v330 = vsub.f32 %v328, %v329
    %v331 = vand.u32 %v330, 4294901760
    %332 = vmatmul.f32.gmra.mxu0 %v331
    %v333 = vpop.f32.mrf.mxu0
    %v334 = vadd.f32 0.0, %v333
    %335 = vdwg.mxu0
    %336 = vmatpush.msra.mxu0 0.0
    %337 = vmatpush.msra.mxu0 0.0
    %338 = vmatpush.msra.mxu0 0.0
    %339 = vmatpush.msra.mxu0 0.0
    %340 = vmatpush.msra.mxu0 0.0
    %341 = vmatpush.msra.mxu0 0.0
    %342 = vmatpush.msra.mxu0 0.0
    %343 = vmatpush.msra.mxu0 0.0
    %v344 = vand.u32 %v19, 4294901760
    %v345 = vsub.f32 %v19, %v344
    %v346 = vand.u32 %v345, 4294901760
    %v347 = vsub.f32 %v345, %v346
    %v348 = vand.u32 %v347, 4294901760
    %349 = vmatpush.msra.mxu0 %v348
    %v350 = vand.u32 %v18, 4294901760
    %v351 = vsub.f32 %v18, %v350
    %v352 = vand.u32 %v351, 4294901760
    %v353 = vsub.f32 %v351, %v352
    %v354 = vand.u32 %v353, 4294901760
    %355 = vmatpush.msra.mxu0 %v354
    %v356 = vand.u32 %v17, 4294901760
    %v357 = vsub.f32 %v17, %v356
    %v358 = vand.u32 %v357, 4294901760
    %v359 = vsub.f32 %v357, %v358
    %v360 = vand.u32 %v359, 4294901760
    %361 = vmatpush.msra.mxu0 %v360
    %v362 = vand.u32 %v16, 4294901760
    %v363 = vsub.f32 %v16, %v362
    %v364 = vand.u32 %v363, 4294901760
    %v365 = vsub.f32 %v363, %v364
    %v366 = vand.u32 %v365, 4294901760
    %367 = vmatpush.msra.mxu0 %v366
    %v368 = vand.u32 %v15, 4294901760
    %v369 = vsub.f32 %v15, %v368
    %v370 = vand.u32 %v369, 4294901760
    %v371 = vsub.f32 %v369, %v370
    %v372 = vand.u32 %v371, 4294901760
    %373 = vmatpush.msra.mxu0 %v372
    %v374 = vand.u32 %v14, 4294901760
    %v375 = vsub.f32 %v14, %v374
    %v376 = vand.u32 %v375, 4294901760
    %v377 = vsub.f32 %v375, %v376
    %v378 = vand.u32 %v377, 4294901760
    %379 = vmatpush.msra.mxu0 %v378
    %v380 = vand.u32 %v13, 4294901760
    %v381 = vsub.f32 %v13, %v380
    %v382 = vand.u32 %v381, 4294901760
    %v383 = vsub.f32 %v381, %v382
    %v384 = vand.u32 %v383, 4294901760
    %385 = vmatpush.msra.mxu0 %v384
    %v386 = vand.u32 %v12, 4294901760
    %v387 = vsub.f32 %v12, %v386
    %v388 = vand.u32 %v387, 4294901760
    %v389 = vsub.f32 %v387, %v388
    %v390 = vand.u32 %v389, 4294901760
    %391 = vmatpush.msra.mxu0 %v390
    %v392 = vand.u32 %v136, 4294901760
    %393 = vmatmul.f32.gmra.mxu0 %v392
    %v394 = vpop.f32.mrf.mxu0
    %v395 = vadd.f32 %v214, %v394
    %v396 = vand.u32 %v139, 4294901760
    %397 = vmatmul.f32.gmra.mxu0 %v396
    %v398 = vpop.f32.mrf.mxu0
    %v399 = vadd.f32 %v222, %v398
    %v400 = vand.u32 %v142, 4294901760
    %401 = vmatmul.f32.gmra.mxu0 %v400
    %v402 = vpop.f32.mrf.mxu0
    %v403 = vadd.f32 %v230, %v402
    %v404 = vand.u32 %v145, 4294901760
    %405 = vmatmul.f32.gmra.mxu0 %v404
    %v406 = vpop.f32.mrf.mxu0
    %v407 = vadd.f32 %v238, %v406
    %v408 = vand.u32 %v148, 4294901760
    %409 = vmatmul.f32.gmra.mxu0 %v408
    %v410 = vpop.f32.mrf.mxu0
    %v411 = vadd.f32 %v246, %v410
    %v412 = vand.u32 %v151, 4294901760
    %413 = vmatmul.f32.gmra.mxu0 %v412
    %v414 = vpop.f32.mrf.mxu0
    %v415 = vadd.f32 %v254, %v414
    %v416 = vand.u32 %v154, 4294901760
    %417 = vmatmul.f32.gmra.mxu0 %v416
    %v418 = vpop.f32.mrf.mxu0
    %v419 = vadd.f32 %v262, %v418
    %v420 = vand.u32 %v157, 4294901760
    %421 = vmatmul.f32.gmra.mxu0 %v420
    %v422 = vpop.f32.mrf.mxu0
    %v423 = vadd.f32 %v270, %v422
    %v424 = vand.u32 %v160, 4294901760
    %425 = vmatmul.f32.gmra.mxu0 %v424
    %v426 = vpop.f32.mrf.mxu0
    %v427 = vadd.f32 %v278, %v426
    %v428 = vand.u32 %v163, 4294901760
    %429 = vmatmul.f32.gmra.mxu0 %v428
    %v430 = vpop.f32.mrf.mxu0
    %v431 = vadd.f32 %v286, %v430
    %v432 = vand.u32 %v166, 4294901760
    %433 = vmatmul.f32.gmra.mxu0 %v432
    %v434 = vpop.f32.mrf.mxu0
    %v435 = vadd.f32 %v294, %v434
    %v436 = vand.u32 %v169, 4294901760
    %437 = vmatmul.f32.gmra.mxu0 %v436
    %v438 = vpop.f32.mrf.mxu0
    %v439 = vadd.f32 %v302, %v438
    %v440 = vand.u32 %v172, 4294901760
    %441 = vmatmul.f32.gmra.mxu0 %v440
    %v442 = vpop.f32.mrf.mxu0
    %v443 = vadd.f32 %v310, %v442
    %v444 = vand.u32 %v175, 4294901760
    %445 = vmatmul.f32.gmra.mxu0 %v444
    %v446 = vpop.f32.mrf.mxu0
    %v447 = vadd.f32 %v318, %v446
    %v448 = vand.u32 %v178, 4294901760
    %449 = vmatmul.f32.gmra.mxu0 %v448
    %v450 = vpop.f32.mrf.mxu0
    %v451 = vadd.f32 %v326, %v450
    %v452 = vand.u32 %v181, 4294901760
    %453 = vmatmul.f32.gmra.mxu0 %v452
    %v454 = vpop.f32.mrf.mxu0
    %v455 = vadd.f32 %v334, %v454
    %456 = vdwg.mxu0
    %457 = vmatpush.msra.mxu0 0.0
    %458 = vmatpush.msra.mxu0 0.0
    %459 = vmatpush.msra.mxu0 0.0
    %460 = vmatpush.msra.mxu0 0.0
    %461 = vmatpush.msra.mxu0 0.0
    %462 = vmatpush.msra.mxu0 0.0
    %463 = vmatpush.msra.mxu0 0.0
    %464 = vmatpush.msra.mxu0 0.0
    %v465 = vand.u32 %v19, 4294901760
    %v466 = vsub.f32 %v19, %v465
    %467 = vmatpush.msra.mxu0 %v466
    %v468 = vand.u32 %v18, 4294901760
    %v469 = vsub.f32 %v18, %v468
    %470 = vmatpush.msra.mxu0 %v469
    %v471 = vand.u32 %v17, 4294901760
    %v472 = vsub.f32 %v17, %v471
    %473 = vmatpush.msra.mxu0 %v472
    %v474 = vand.u32 %v16, 4294901760
    %v475 = vsub.f32 %v16, %v474
    %476 = vmatpush.msra.mxu0 %v475
    %v477 = vand.u32 %v15, 4294901760
    %v478 = vsub.f32 %v15, %v477
    %479 = vmatpush.msra.mxu0 %v478
    %v480 = vand.u32 %v14, 4294901760
    %v481 = vsub.f32 %v14, %v480
    %482 = vmatpush.msra.mxu0 %v481
    %v483 = vand.u32 %v13, 4294901760
    %v484 = vsub.f32 %v13, %v483
    %485 = vmatpush.msra.mxu0 %v484
    %v486 = vand.u32 %v12, 4294901760
    %v487 = vsub.f32 %v12, %v486
    %488 = vmatpush.msra.mxu0 %v487
    %v489 = vand.u32 %v136, 4294901760
    %v490 = vsub.f32 %v136, %v489
    %491 = vmatmul.f32.gmra.mxu0 %v490
    %v492 = vpop.f32.mrf.mxu0
    %v493 = vadd.f32 %v395, %v492
    %v494 = vand.u32 %v139, 4294901760
    %v495 = vsub.f32 %v139, %v494
    %496 = vmatmul.f32.gmra.mxu0 %v495
    %v497 = vpop.f32.mrf.mxu0
    %v498 = vadd.f32 %v399, %v497
    %v499 = vand.u32 %v142, 4294901760
    %v500 = vsub.f32 %v142, %v499
    %501 = vmatmul.f32.gmra.mxu0 %v500
    %v502 = vpop.f32.mrf.mxu0
    %v503 = vadd.f32 %v403, %v502
    %v504 = vand.u32 %v145, 4294901760
    %v505 = vsub.f32 %v145, %v504
    %506 = vmatmul.f32.gmra.mxu0 %v505
    %v507 = vpop.f32.mrf.mxu0
    %v508 = vadd.f32 %v407, %v507
    %v509 = vand.u32 %v148, 4294901760
    %v510 = vsub.f32 %v148, %v509
    %511 = vmatmul.f32.gmra.mxu0 %v510
    %v512 = vpop.f32.mrf.mxu0
    %v513 = vadd.f32 %v411, %v512
    %v514 = vand.u32 %v151, 4294901760
    %v515 = vsub.f32 %v151, %v514
    %516 = vmatmul.f32.gmra.mxu0 %v515
    %v517 = vpop.f32.mrf.mxu0
    %v518 = vadd.f32 %v415, %v517
    %v519 = vand.u32 %v154, 4294901760
    %v520 = vsub.f32 %v154, %v519
    %521 = vmatmul.f32.gmra.mxu0 %v520
    %v522 = vpop.f32.mrf.mxu0
    %v523 = vadd.f32 %v419, %v522
    %v524 = vand.u32 %v157, 4294901760
    %v525 = vsub.f32 %v157, %v524
    %526 = vmatmul.f32.gmra.mxu0 %v525
    %v527 = vpop.f32.mrf.mxu0
    %v528 = vadd.f32 %v423, %v527
    %v529 = vand.u32 %v160, 4294901760
    %v530 = vsub.f32 %v160, %v529
    %531 = vmatmul.f32.gmra.mxu0 %v530
    %v532 = vpop.f32.mrf.mxu0
    %v533 = vadd.f32 %v427, %v532
    %v534 = vand.u32 %v163, 4294901760
    %v535 = vsub.f32 %v163, %v534
    %536 = vmatmul.f32.gmra.mxu0 %v535
    %v537 = vpop.f32.mrf.mxu0
    %v538 = vadd.f32 %v431, %v537
    %v539 = vand.u32 %v166, 4294901760
    %v540 = vsub.f32 %v166, %v539
    %541 = vmatmul.f32.gmra.mxu0 %v540
    %v542 = vpop.f32.mrf.mxu0
    %v543 = vadd.f32 %v435, %v542
    %v544 = vand.u32 %v169, 4294901760
    %v545 = vsub.f32 %v169, %v544
    %546 = vmatmul.f32.gmra.mxu0 %v545
    %v547 = vpop.f32.mrf.mxu0
    %v548 = vadd.f32 %v439, %v547
    %v549 = vand.u32 %v172, 4294901760
    %v550 = vsub.f32 %v172, %v549
    %551 = vmatmul.f32.gmra.mxu0 %v550
    %v552 = vpop.f32.mrf.mxu0
    %v553 = vadd.f32 %v443, %v552
    %v554 = vand.u32 %v175, 4294901760
    %v555 = vsub.f32 %v175, %v554
    %556 = vmatmul.f32.gmra.mxu0 %v555
    %v557 = vpop.f32.mrf.mxu0
    %v558 = vadd.f32 %v447, %v557
    %v559 = vand.u32 %v178, 4294901760
    %v560 = vsub.f32 %v178, %v559
    %561 = vmatmul.f32.gmra.mxu0 %v560
    %v562 = vpop.f32.mrf.mxu0
    %v563 = vadd.f32 %v451, %v562
    %v564 = vand.u32 %v181, 4294901760
    %v565 = vsub.f32 %v181, %v564
    %566 = vmatmul.f32.gmra.mxu0 %v565
    %v567 = vpop.f32.mrf.mxu0
    %v568 = vadd.f32 %v455, %v567
    %569 = vdwg.mxu0
    %570 = vmatpush.msra.mxu0 0.0
    %571 = vmatpush.msra.mxu0 0.0
    %572 = vmatpush.msra.mxu0 0.0
    %573 = vmatpush.msra.mxu0 0.0
    %574 = vmatpush.msra.mxu0 0.0
    %575 = vmatpush.msra.mxu0 0.0
    %576 = vmatpush.msra.mxu0 0.0
    %577 = vmatpush.msra.mxu0 0.0
    %v578 = vand.u32 %v19, 4294901760
    %579 = vmatpush.msra.mxu0 %v578
    %v580 = vand.u32 %v18, 4294901760
    %581 = vmatpush.msra.mxu0 %v580
    %v582 = vand.u32 %v17, 4294901760
    %583 = vmatpush.msra.mxu0 %v582
    %v584 = vand.u32 %v16, 4294901760
    %585 = vmatpush.msra.mxu0 %v584
    %v586 = vand.u32 %v15, 4294901760
    %587 = vmatpush.msra.mxu0 %v586
    %v588 = vand.u32 %v14, 4294901760
    %589 = vmatpush.msra.mxu0 %v588
    %v590 = vand.u32 %v13, 4294901760
    %591 = vmatpush.msra.mxu0 %v590
    %v592 = vand.u32 %v12, 4294901760
    %593 = vmatpush.msra.mxu0 %v592
    %v594 = vand.u32 %v136, 4294901760
    %v595 = vsub.f32 %v136, %v594
    %v596 = vand.u32 %v595, 4294901760
    %597 = vmatmul.f32.gmra.mxu0 %v596
    %v598 = vpop.f32.mrf.mxu0
    %v599 = vadd.f32 %v493, %v598
    %v600 = vand.u32 %v139, 4294901760
    %v601 = vsub.f32 %v139, %v600
    %v602 = vand.u32 %v601, 4294901760
    %603 = vmatmul.f32.gmra.mxu0 %v602
    %v604 = vpop.f32.mrf.mxu0
    %v605 = vadd.f32 %v498, %v604
    %v606 = vand.u32 %v142, 4294901760
    %v607 = vsub.f32 %v142, %v606
    %v608 = vand.u32 %v607, 4294901760
    %609 = vmatmul.f32.gmra.mxu0 %v608
    %v610 = vpop.f32.mrf.mxu0
    %v611 = vadd.f32 %v503, %v610
    %v612 = vand.u32 %v145, 4294901760
    %v613 = vsub.f32 %v145, %v612
    %v614 = vand.u32 %v613, 4294901760
    %615 = vmatmul.f32.gmra.mxu0 %v614
    %v616 = vpop.f32.mrf.mxu0
    %v617 = vadd.f32 %v508, %v616
    %v618 = vand.u32 %v148, 4294901760
    %v619 = vsub.f32 %v148, %v618
    %v620 = vand.u32 %v619, 4294901760
    %621 = vmatmul.f32.gmra.mxu0 %v620
    %v622 = vpop.f32.mrf.mxu0
    %v623 = vadd.f32 %v513, %v622
    %v624 = vand.u32 %v151, 4294901760
    %v625 = vsub.f32 %v151, %v624
    %v626 = vand.u32 %v625, 4294901760
    %627 = vmatmul.f32.gmra.mxu0 %v626
    %v628 = vpop.f32.mrf.mxu0
    %v629 = vadd.f32 %v518, %v628
    %v630 = vand.u32 %v154, 4294901760
    %v631 = vsub.f32 %v154, %v630
    %v632 = vand.u32 %v631, 4294901760
    %633 = vmatmul.f32.gmra.mxu0 %v632
    %v634 = vpop.f32.mrf.mxu0
    %v635 = vadd.f32 %v523, %v634
    %v636 = vand.u32 %v157, 4294901760
    %v637 = vsub.f32 %v157, %v636
    %v638 = vand.u32 %v637, 4294901760
    %639 = vmatmul.f32.gmra.mxu0 %v638
    %v640 = vpop.f32.mrf.mxu0
    %v641 = vadd.f32 %v528, %v640
    %v642 = vand.u32 %v160, 4294901760
    %v643 = vsub.f32 %v160, %v642
    %v644 = vand.u32 %v643, 4294901760
    %645 = vmatmul.f32.gmra.mxu0 %v644
    %v646 = vpop.f32.mrf.mxu0
    %v647 = vadd.f32 %v533, %v646
    %v648 = vand.u32 %v163, 4294901760
    %v649 = vsub.f32 %v163, %v648
    %v650 = vand.u32 %v649, 4294901760
    %651 = vmatmul.f32.gmra.mxu0 %v650
    %v652 = vpop.f32.mrf.mxu0
    %v653 = vadd.f32 %v538, %v652
    %v654 = vand.u32 %v166, 4294901760
    %v655 = vsub.f32 %v166, %v654
    %v656 = vand.u32 %v655, 4294901760
    %657 = vmatmul.f32.gmra.mxu0 %v656
    %v658 = vpop.f32.mrf.mxu0
    %v659 = vadd.f32 %v543, %v658
    %v660 = vand.u32 %v169, 4294901760
    %v661 = vsub.f32 %v169, %v660
    %v662 = vand.u32 %v661, 4294901760
    %663 = vmatmul.f32.gmra.mxu0 %v662
    %v664 = vpop.f32.mrf.mxu0
    %v665 = vadd.f32 %v548, %v664
    %v666 = vand.u32 %v172, 4294901760
    %v667 = vsub.f32 %v172, %v666
    %v668 = vand.u32 %v667, 4294901760
    %669 = vmatmul.f32.gmra.mxu0 %v668
    %v670 = vpop.f32.mrf.mxu0
    %v671 = vadd.f32 %v553, %v670
    %v672 = vand.u32 %v175, 4294901760
    %v673 = vsub.f32 %v175, %v672
    %v674 = vand.u32 %v673, 4294901760
    %675 = vmatmul.f32.gmra.mxu0 %v674
    %v676 = vpop.f32.mrf.mxu0
    %v677 = vadd.f32 %v558, %v676
    %v678 = vand.u32 %v178, 4294901760
    %v679 = vsub.f32 %v178, %v678
    %v680 = vand.u32 %v679, 4294901760
    %681 = vmatmul.f32.gmra.mxu0 %v680
    %v682 = vpop.f32.mrf.mxu0
    %v683 = vadd.f32 %v563, %v682
    %v684 = vand.u32 %v181, 4294901760
    %v685 = vsub.f32 %v181, %v684
    %v686 = vand.u32 %v685, 4294901760
    %687 = vmatmul.f32.gmra.mxu0 %v686
    %v688 = vpop.f32.mrf.mxu0
    %v689 = vadd.f32 %v568, %v688
    %690 = vdwg.mxu0
    %691 = vmatpush.msra.mxu0 0.0
    %692 = vmatpush.msra.mxu0 0.0
    %693 = vmatpush.msra.mxu0 0.0
    %694 = vmatpush.msra.mxu0 0.0
    %695 = vmatpush.msra.mxu0 0.0
    %696 = vmatpush.msra.mxu0 0.0
    %697 = vmatpush.msra.mxu0 0.0
    %698 = vmatpush.msra.mxu0 0.0
    %v699 = vand.u32 %v19, 4294901760
    %v700 = vsub.f32 %v19, %v699
    %v701 = vand.u32 %v700, 4294901760
    %702 = vmatpush.msra.mxu0 %v701
    %v703 = vand.u32 %v18, 4294901760
    %v704 = vsub.f32 %v18, %v703
    %v705 = vand.u32 %v704, 4294901760
    %706 = vmatpush.msra.mxu0 %v705
    %v707 = vand.u32 %v17, 4294901760
    %v708 = vsub.f32 %v17, %v707
    %v709 = vand.u32 %v708, 4294901760
    %710 = vmatpush.msra.mxu0 %v709
    %v711 = vand.u32 %v16, 4294901760
    %v712 = vsub.f32 %v16, %v711
    %v713 = vand.u32 %v712, 4294901760
    %714 = vmatpush.msra.mxu0 %v713
    %v715 = vand.u32 %v15, 4294901760
    %v716 = vsub.f32 %v15, %v715
    %v717 = vand.u32 %v716, 4294901760
    %718 = vmatpush.msra.mxu0 %v717
    %v719 = vand.u32 %v14, 4294901760
    %v720 = vsub.f32 %v14, %v719
    %v721 = vand.u32 %v720, 4294901760
    %722 = vmatpush.msra.mxu0 %v721
    %v723 = vand.u32 %v13, 4294901760
    %v724 = vsub.f32 %v13, %v723
    %v725 = vand.u32 %v724, 4294901760
    %726 = vmatpush.msra.mxu0 %v725
    %v727 = vand.u32 %v12, 4294901760
    %v728 = vsub.f32 %v12, %v727
    %v729 = vand.u32 %v728, 4294901760
    %730 = vmatpush.msra.mxu0 %v729
    %v731 = vand.u32 %v136, 4294901760
    %732 = vmatmul.f32.gmra.mxu0 %v731
    %v733 = vpop.f32.mrf.mxu0
    %v734 = vadd.f32 %v599, %v733
    %v735 = vand.u32 %v139, 4294901760
    %736 = vmatmul.f32.gmra.mxu0 %v735
    %v737 = vpop.f32.mrf.mxu0
    %v738 = vadd.f32 %v605, %v737
    %v739 = vand.u32 %v142, 4294901760
    %740 = vmatmul.f32.gmra.mxu0 %v739
    %v741 = vpop.f32.mrf.mxu0
    %v742 = vadd.f32 %v611, %v741
    %v743 = vand.u32 %v145, 4294901760
    %744 = vmatmul.f32.gmra.mxu0 %v743
    %v745 = vpop.f32.mrf.mxu0
    %v746 = vadd.f32 %v617, %v745
    %v747 = vand.u32 %v148, 4294901760
    %748 = vmatmul.f32.gmra.mxu0 %v747
    %v749 = vpop.f32.mrf.mxu0
    %v750 = vadd.f32 %v623, %v749
    %v751 = vand.u32 %v151, 4294901760
    %752 = vmatmul.f32.gmra.mxu0 %v751
    %v753 = vpop.f32.mrf.mxu0
    %v754 = vadd.f32 %v629, %v753
    %v755 = vand.u32 %v154, 4294901760
    %756 = vmatmul.f32.gmra.mxu0 %v755
    %v757 = vpop.f32.mrf.mxu0
    %v758 = vadd.f32 %v635, %v757
    %v759 = vand.u32 %v157, 4294901760
    %760 = vmatmul.f32.gmra.mxu0 %v759
    %v761 = vpop.f32.mrf.mxu0
    %v762 = vadd.f32 %v641, %v761
    %v763 = vand.u32 %v160, 4294901760
    %764 = vmatmul.f32.gmra.mxu0 %v763
    %v765 = vpop.f32.mrf.mxu0
    %v766 = vadd.f32 %v647, %v765
    %v767 = vand.u32 %v163, 4294901760
    %768 = vmatmul.f32.gmra.mxu0 %v767
    %v769 = vpop.f32.mrf.mxu0
    %v770 = vadd.f32 %v653, %v769
    %v771 = vand.u32 %v166, 4294901760
    %772 = vmatmul.f32.gmra.mxu0 %v771
    %v773 = vpop.f32.mrf.mxu0
    %v774 = vadd.f32 %v659, %v773
    %v775 = vand.u32 %v169, 4294901760
    %776 = vmatmul.f32.gmra.mxu0 %v775
    %v777 = vpop.f32.mrf.mxu0
    %v778 = vadd.f32 %v665, %v777
    %v779 = vand.u32 %v172, 4294901760
    %780 = vmatmul.f32.gmra.mxu0 %v779
    %v781 = vpop.f32.mrf.mxu0
    %v782 = vadd.f32 %v671, %v781
    %v783 = vand.u32 %v175, 4294901760
    %784 = vmatmul.f32.gmra.mxu0 %v783
    %v785 = vpop.f32.mrf.mxu0
    %v786 = vadd.f32 %v677, %v785
    %v787 = vand.u32 %v178, 4294901760
    %788 = vmatmul.f32.gmra.mxu0 %v787
    %v789 = vpop.f32.mrf.mxu0
    %v790 = vadd.f32 %v683, %v789
    %v791 = vand.u32 %v181, 4294901760
    %792 = vmatmul.f32.gmra.mxu0 %v791
    %v793 = vpop.f32.mrf.mxu0
    %v794 = vadd.f32 %v689, %v793
    %795 = vdwg.mxu0
    %796 = vmatpush.msra.mxu0 0.0
    %797 = vmatpush.msra.mxu0 0.0
    %798 = vmatpush.msra.mxu0 0.0
    %799 = vmatpush.msra.mxu0 0.0
    %800 = vmatpush.msra.mxu0 0.0
    %801 = vmatpush.msra.mxu0 0.0
    %802 = vmatpush.msra.mxu0 0.0
    %803 = vmatpush.msra.mxu0 0.0
    %v804 = vand.u32 %v19, 4294901760
    %805 = vmatpush.msra.mxu0 %v804
    %v806 = vand.u32 %v18, 4294901760
    %807 = vmatpush.msra.mxu0 %v806
    %v808 = vand.u32 %v17, 4294901760
    %809 = vmatpush.msra.mxu0 %v808
    %v810 = vand.u32 %v16, 4294901760
    %811 = vmatpush.msra.mxu0 %v810
    %v812 = vand.u32 %v15, 4294901760
    %813 = vmatpush.msra.mxu0 %v812
    %v814 = vand.u32 %v14, 4294901760
    %815 = vmatpush.msra.mxu0 %v814
    %v816 = vand.u32 %v13, 4294901760
    %817 = vmatpush.msra.mxu0 %v816
    %v818 = vand.u32 %v12, 4294901760
    %819 = vmatpush.msra.mxu0 %v818
    %v820 = vand.u32 %v136, 4294901760
    %821 = vmatmul.f32.gmra.mxu0 %v820
    %v822 = vpop.f32.mrf.mxu0
    %v823 = vadd.f32 %v734, %v822
    %v824 = vand.u32 %v139, 4294901760
    %825 = vmatmul.f32.gmra.mxu0 %v824
    %v826 = vpop.f32.mrf.mxu0
    %v827 = vadd.f32 %v738, %v826
    %v828 = vand.u32 %v142, 4294901760
    %829 = vmatmul.f32.gmra.mxu0 %v828
    %v830 = vpop.f32.mrf.mxu0
    %v831 = vadd.f32 %v742, %v830
    %v832 = vand.u32 %v145, 4294901760
    %833 = vmatmul.f32.gmra.mxu0 %v832
    %v834 = vpop.f32.mrf.mxu0
    %v835 = vadd.f32 %v746, %v834
    %v836 = vand.u32 %v148, 4294901760
    %837 = vmatmul.f32.gmra.mxu0 %v836
    %v838 = vpop.f32.mrf.mxu0
    %v839 = vadd.f32 %v750, %v838
    %v840 = vand.u32 %v151, 4294901760
    %841 = vmatmul.f32.gmra.mxu0 %v840
    %v842 = vpop.f32.mrf.mxu0
    %v843 = vadd.f32 %v754, %v842
    %v844 = vand.u32 %v154, 4294901760
    %845 = vmatmul.f32.gmra.mxu0 %v844
    %v846 = vpop.f32.mrf.mxu0
    %v847 = vadd.f32 %v758, %v846
    %v848 = vand.u32 %v157, 4294901760
    %849 = vmatmul.f32.gmra.mxu0 %v848
    %v850 = vpop.f32.mrf.mxu0
    %v851 = vadd.f32 %v762, %v850
    %v852 = vand.u32 %v160, 4294901760
    %853 = vmatmul.f32.gmra.mxu0 %v852
    %v854 = vpop.f32.mrf.mxu0
    %v855 = vadd.f32 %v766, %v854
    %v856 = vand.u32 %v163, 4294901760
    %857 = vmatmul.f32.gmra.mxu0 %v856
    %v858 = vpop.f32.mrf.mxu0
    %v859 = vadd.f32 %v770, %v858
    %v860 = vand.u32 %v166, 4294901760
    %861 = vmatmul.f32.gmra.mxu0 %v860
    %v862 = vpop.f32.mrf.mxu0
    %v863 = vadd.f32 %v774, %v862
    %v864 = vand.u32 %v169, 4294901760
    %865 = vmatmul.f32.gmra.mxu0 %v864
    %v866 = vpop.f32.mrf.mxu0
    %v867 = vadd.f32 %v778, %v866
    %v868 = vand.u32 %v172, 4294901760
    %869 = vmatmul.f32.gmra.mxu0 %v868
    %v870 = vpop.f32.mrf.mxu0
    %v871 = vadd.f32 %v782, %v870
    %v872 = vand.u32 %v175, 4294901760
    %873 = vmatmul.f32.gmra.mxu0 %v872
    %v874 = vpop.f32.mrf.mxu0
    %v875 = vadd.f32 %v786, %v874
    %v876 = vand.u32 %v178, 4294901760
    %877 = vmatmul.f32.gmra.mxu0 %v876
    %v878 = vpop.f32.mrf.mxu0
    %v879 = vadd.f32 %v790, %v878
    %v880 = vand.u32 %v181, 4294901760
    %881 = vmatmul.f32.gmra.mxu0 %v880
    %v882 = vpop.f32.mrf.mxu0
    %v883 = vadd.f32 %v794, %v882
    %884 = vdwg.mxu0
    %885 = vst [vmem:[#allocation2] sm:$0xff] %v823
    %886 = vst [vmem:[#allocation2 + $0x8] sm:$0xff] %v827
    %887 = vst [vmem:[#allocation2 + $0x10] sm:$0xff] %v831
    %888 = vst [vmem:[#allocation2 + $0x18] sm:$0xff] %v835
    %889 = vst [vmem:[#allocation2 + $0x20] sm:$0xff] %v839
    %890 = vst [vmem:[#allocation2 + $0x28] sm:$0xff] %v843
    %891 = vst [vmem:[#allocation2 + $0x30] sm:$0xff] %v847
    %892 = vst [vmem:[#allocation2 + $0x38] sm:$0xff] %v851
    %893 = vst [vmem:[#allocation2 + $0x40] sm:$0xff] %v855
    %894 = vst [vmem:[#allocation2 + $0x48] sm:$0xff] %v859
    %895 = vst [vmem:[#allocation2 + $0x50] sm:$0xff] %v863
    %896 = vst [vmem:[#allocation2 + $0x58] sm:$0xff] %v867
    %897 = vst [vmem:[#allocation2 + $0x60] sm:$0xff] %v871
    %898 = vst [vmem:[#allocation2 + $0x68] sm:$0xff] %v875
    %899 = vst [vmem:[#allocation2 + $0x70] sm:$0xff] %v879
    %900 = vst [vmem:[#allocation2 + $0x78] sm:$0xff] %v883
    // Predicated region
    $region10: #{tpu_custom_call.1} parent=1 // pred_check
      _
    $region11: #{tpu_custom_call.1} parent=1 // pred_check_branch
      %902 = sbr.rel (0) target = $region13
    $region12: #{tpu_custom_call.1} parent=1 // pred_region
      %904 = vsyncadd [#allocation3], 0
      %s905 = sshll.u32 [#allocation2], 4
      %s906 = int_to_ptr.vmem [resolvable:$true] %s905
      %s907 = sshll.u32 %s2, 4
      %s908 = int_to_ptr.hbm [resolvable:$true] %s907
      %913 = dma.vmem_to_hbm [thread:$0]  %s906, 2048, %s908, [#allocation3], 128, 128, 8
    $region13: #{tpu_custom_call.1} parent=1 // pred_fallthru
      _
    // Predicated region
    $region14: #{tpu_custom_call.1} parent=1 // pred_check
      _
    $region15: #{tpu_custom_call.1} parent=1 // pred_check_branch
      %915 = sbr.rel (0) target = $region17
    $region16: #{tpu_custom_call.1} parent=1 // pred_region
      %917 = dma.done [#allocation3], 2048
    $region17: #{tpu_custom_call.1} parent=1 // pred_fallthru
      _
    %918 = vsyncpa [#allocation3], 1

</llo_original>
